<compile_context>
chip_gen: v6e
topology: v6e:2x2x1
jax: 0.10.0
libtpu: 0.0.40
codegen_flags: <defaults>
</compile_context>

<pallas_src>
import jax
import jax.numpy as jnp
import numpy as np
from jax.experimental import pallas as pl
from jax.experimental.pallas import tpu as pltpu  # noqa: F401  (TPU backend)

# ---------------------------------------------------------------------------
# Problem sizes (small, consistent with the module's forward)
# ---------------------------------------------------------------------------
C_IN, H, W = 4, 16, 16           # single image, CHW
C_OUT = 8                        # conv output channels
KH = KW = 3                      # conv kernel
HW = H * W                       # 256 spatial positions (lane-dense axis)
FEAT = C_OUT * HW                # 2048 flattened conv features (CHW order)
LATENT = 32                      # embedding_net.latent_space_dim
KDIM = C_IN * KH * KW            # 36 im2col rows


# ---------------------------------------------------------------------------
# Fused Pallas kernel: conv(x2) + bias + ReLU -> fc -> cat -> ReLU -> Linear -> sigmoid
# ---------------------------------------------------------------------------
def fused_kernel(p1_ref, p2_ref, wconv_ref, bconv_ref, wfc_ref, bfc_ref,
                 wcls_ref, bcls_ref, o_ref):
    wconv = wconv_ref[...]                              # [C_OUT, KDIM]   = [8, 36]
    bconv = bconv_ref[...]                              # [C_OUT, 1]      = [8, 1]

    # Conv as one lane-dense matmul per image: [8,36] @ [36,256] -> [8,256]
    h1 = jnp.maximum(
        jnp.dot(wconv, p1_ref[...], preferred_element_type=jnp.float32) + bconv, 0.0)
    h2 = jnp.maximum(
        jnp.dot(wconv, p2_ref[...], preferred_element_type=jnp.float32) + bconv, 0.0)

    # Embedding Linear(FEAT -> LATENT), features in CHW order.
    # Per-channel accumulation avoids any in-kernel [8,256]->[1,2048] reshape.
    e1 = jnp.zeros((1, LATENT), jnp.float32)
    e2 = jnp.zeros((1, LATENT), jnp.float32)
    for c in range(C_OUT):                               # static unroll (8 iters)
        wc = wfc_ref[c]                                  # [HW, LATENT] = [256, 32]
        e1 = e1 + jnp.dot(h1[c:c + 1, :], wc, preferred_element_type=jnp.float32)
        e2 = e2 + jnp.dot(h2[c:c + 1, :], wc, preferred_element_type=jnp.float32)
    emb = jnp.concatenate([e1, e2], axis=0) + bfc_ref[...]   # [2, LATENT]

    # classifier = Sequential(ReLU, Linear(2*LATENT, 1)); then Sigmoid.
    # Linear(64 -> 1) done as a VPU multiply-reduce instead of a degenerate MXU dot.
    z = jnp.maximum(emb, 0.0)                            # [2, LATENT]
    prod = z * wcls_ref[...]                             # [2, LATENT]
    logit = jnp.sum(jnp.sum(prod, axis=1, keepdims=True), axis=0, keepdims=True)
    o_ref[...] = jax.nn.sigmoid(logit + bcls_ref[...])   # [1, 1]


def _zero_map(ndim):
    return lambda i: (0,) * ndim


# ---------------------------------------------------------------------------
# Glue: im2col (thin XLA ops), hoisted weight layouts, forward
# ---------------------------------------------------------------------------
def im2col_kt(x):
    """x: [C, H, W] -> patches [C*KH*KW, H*W] (pad=1, stride=1, 3x3).

    Row index = c*9 + (di*3 + dj); column index = i*W + j (lane-dense spatial).
    """
    xp = jnp.pad(x, ((0, 0), (1, 1), (1, 1)))
    taps = [xp[:, di:di + H, dj:dj + W].reshape(C_IN, HW)
            for di in range(KH) for dj in range(KW)]
    return jnp.stack(taps, axis=1).reshape(KDIM, HW)      # [36, 256]


def init_params(key):
    """PyTorch-layout parameters (conv OIHW, linear [out, in])."""
    ks = jax.random.split(key, 6)
    return {
        "conv_w": 0.10 * jax.random.normal(ks[0], (C_OUT, C_IN, KH, KW), jnp.float32),
        "conv_b": 0.10 * jax.random.normal(ks[1], (C_OUT,), jnp.float32),
        "fc_w":   0.02 * jax.random.normal(ks[2], (LATENT, FEAT), jnp.float32),
        "fc_b":   0.02 * jax.random.normal(ks[3], (LATENT,), jnp.float32),
        # ClassificationNet.classifier = Sequential(ReLU, Linear(2*LATENT, 1))
        "cls_w":  0.10 * jax.random.normal(ks[4], (1, 2 * LATENT), jnp.float32),
        "cls_b":  0.10 * jax.random.normal(ks[5], (1,), jnp.float32),
    }


def prepare_kernel_params(p):
    """One-time re-layout of weights into the exact layouts the kernel consumes."""
    return {
        # conv weight as [C_OUT, C_IN*KH*KW], columns ordered (c, tap) = im2col rows
        "conv_w_kt": p["conv_w"].reshape(C_OUT, KDIM),
        "conv_b_col": p["conv_b"].reshape(C_OUT, 1),
        # fc weight reorganized to [C_OUT, HW, LATENT] so wfc[c, k, l] = fc_w[l, c*HW + k]
        "fc_w_kt": p["fc_w"].reshape(LATENT, C_OUT, HW).transpose(1, 2, 0),
        "fc_b_row": p["fc_b"].reshape(1, LATENT),
        # classifier weight split into the two embedding halves: [2, LATENT]
        "cls_w_2x": p["cls_w"].reshape(2, LATENT),
        "cls_b_11": p["cls_b"].reshape(1, 1),
    }


def classification_net_forward(kparams, input1, input2):
    """input1, input2: [C, H, W] -> sigmoid probability, shape [1]."""
    p1 = im2col_kt(input1)                                # [36, 256]
    p2 = im2col_kt(input2)                                # [36, 256]
    args = (p1, p2,
            kparams["conv_w_kt"], kparams["conv_b_col"],
            kparams["fc_w_kt"], kparams["fc_b_row"],
            kparams["cls_w_2x"], kparams["cls_b_11"])
    out = pl.pallas_call(
        fused_kernel,
        grid=(1,),
        in_specs=[pl.BlockSpec(a.shape, _zero_map(a.ndim)) for a in args],
        out_specs=pl.BlockSpec((1, 1), _zero_map(2)),
        out_shape=jax.ShapeDtypeStruct((1, 1), jnp.float32),
    )(*args)
    return out.reshape(1)                                 # PyTorch output: [1]


# ---------------------------------------------------------------------------
# Pure-JAX reference (for self-check), PyTorch-layout params
# ---------------------------------------------------------------------------
def reference_forward(params, input1, input2):
    def emb(x):
        y = jax.lax.conv_general_dilated(
            x[None], params["conv_w"], (1, 1), "SAME",
            dimension_numbers=("NCHW", "OIHW", "NCHW"),
        )[0] + params["conv_b"][:, None, None]
        y = jnp.maximum(y, 0.0)                           # [C_OUT, H, W]
        f = y.reshape(-1)                                 # CHW flatten (PyTorch .view(-1))
        return params["fc_w"] @ f + params["fc_b"]        # [LATENT]

    e1, e2 = emb(input1), emb(input2)
    z = jnp.concatenate([e1, e2], axis=0)                 # cat(dim=0) -> [2*LATENT]
    z = jnp.maximum(z, 0.0)
    logit = params["cls_w"] @ z + params["cls_b"]
    return jax.nn.sigmoid(logit)                          # [1]


# ---------------------------------------------------------------------------
if __name__ == "__main__":
    key = jax.random.PRNGKey(0)
    k_p, k_x1, k_x2 = jax.random.split(key, 3)

    params = init_params(k_p)
    kparams = prepare_kernel_params(params)               # hoisted, outside the jitted forward
    input1 = jax.random.normal(k_x1, (C_IN, H, W), jnp.float32)
    input2 = jax.random.normal(k_x2, (C_IN, H, W), jnp.float32)

    out = jax.jit(classification_net_forward)(kparams, input1, input2)
    out = jax.block_until_ready(out)

    ref = jax.block_until_ready(reference_forward(params, input1, input2))
    np.testing.assert_allclose(np.asarray(out), np.asarray(ref), rtol=1e-5, atol=1e-5)

    print("KERNEL_OK")
</pallas_src>

<mosaic_0001>
module attributes {stable_mosaic.version = 11 : i64} {
  func.func @fused_kernel(%arg0: i32, %arg1: memref<36x256xf32, #tpu.memory_space<vmem>>, %arg2: memref<36x256xf32, #tpu.memory_space<vmem>>, %arg3: memref<8x36xf32, #tpu.memory_space<vmem>>, %arg4: memref<8x1xf32, #tpu.memory_space<vmem>>, %arg5: memref<8x256x32xf32, #tpu.memory_space<vmem>>, %arg6: memref<1x32xf32, #tpu.memory_space<vmem>>, %arg7: memref<2x32xf32, #tpu.memory_space<vmem>>, %arg8: memref<1x1xf32, #tpu.memory_space<vmem>>, %arg9: memref<1x1xf32, #tpu.memory_space<vmem>>) attributes {dimension_semantics = [#tpu.dimension_semantics<arbitrary>], iteration_bounds = array<i64: 1>, scalar_prefetch = 0 : i64, scratch_operands = 0 : i64, tpu.core_type = #tpu.core_type<tc>, window_params = [{pipeline_mode = #tpu.pipeline_mode<synchronous>, transform_indices = @transform_0, window_bounds = array<i64: 36, 256>}, {pipeline_mode = #tpu.pipeline_mode<synchronous>, transform_indices = @transform_1, window_bounds = array<i64: 36, 256>}, {pipeline_mode = #tpu.pipeline_mode<synchronous>, transform_indices = @transform_2, window_bounds = array<i64: 8, 36>}, {pipeline_mode = #tpu.pipeline_mode<synchronous>, transform_indices = @transform_3, window_bounds = array<i64: 8, 1>}, {pipeline_mode = #tpu.pipeline_mode<synchronous>, transform_indices = @transform_4, window_bounds = array<i64: 8, 256, 32>}, {pipeline_mode = #tpu.pipeline_mode<synchronous>, transform_indices = @transform_5, window_bounds = array<i64: 1, 32>}, {pipeline_mode = #tpu.pipeline_mode<synchronous>, transform_indices = @transform_6, window_bounds = array<i64: 2, 32>}, {pipeline_mode = #tpu.pipeline_mode<synchronous>, transform_indices = @transform_7, window_bounds = array<i64: 1, 1>}, {pipeline_mode = #tpu.pipeline_mode<synchronous>, transform_indices = @transform_8, window_bounds = array<i64: 1, 1>}]} {
    %c0 = arith.constant 0 : index
    %c0_0 = arith.constant 0 : index
    %0 = vector.load %arg3[%c0, %c0_0] : memref<8x36xf32, #tpu.memory_space<vmem>>, vector<8x36xf32>
    %c0_1 = arith.constant 0 : index
    %c0_2 = arith.constant 0 : index
    %1 = vector.load %arg4[%c0_1, %c0_2] : memref<8x1xf32, #tpu.memory_space<vmem>>, vector<8x1xf32>
    %c0_3 = arith.constant 0 : index
    %c0_4 = arith.constant 0 : index
    %2 = vector.load %arg1[%c0_3, %c0_4] : memref<36x256xf32, #tpu.memory_space<vmem>>, vector<36x256xf32>
    %cst = arith.constant dense<0.000000e+00> : vector<8x256xf32>
    %3 = tpu.matmul %0, %2, %cst {dimension_numbers = #tpu.dot_dimension_numbers<[1], [0], [0], [1], [0, 0, 1, 1], [], []>} : vector<8x36xf32>, vector<36x256xf32>, vector<8x256xf32> -> vector<8x256xf32>
    %4 = vector.broadcast %1 : vector<8x1xf32> to vector<8x256xf32>
    %5 = arith.addf %3, %4 : vector<8x256xf32>
    %cst_5 = arith.constant 0.000000e+00 : f32
    %6 = vector.broadcast %cst_5 : f32 to vector<8x256xf32>
    %7 = arith.maximumf %5, %6 : vector<8x256xf32>
    %c0_6 = arith.constant 0 : index
    %c0_7 = arith.constant 0 : index
    %8 = vector.load %arg2[%c0_6, %c0_7] : memref<36x256xf32, #tpu.memory_space<vmem>>, vector<36x256xf32>
    %cst_8 = arith.constant dense<0.000000e+00> : vector<8x256xf32>
    %9 = tpu.matmul %0, %8, %cst_8 {dimension_numbers = #tpu.dot_dimension_numbers<[1], [0], [0], [1], [0, 0, 1, 1], [], []>} : vector<8x36xf32>, vector<36x256xf32>, vector<8x256xf32> -> vector<8x256xf32>
    %10 = vector.broadcast %1 : vector<8x1xf32> to vector<8x256xf32>
    %11 = arith.addf %9, %10 : vector<8x256xf32>
    %cst_9 = arith.constant 0.000000e+00 : f32
    %12 = vector.broadcast %cst_9 : f32 to vector<8x256xf32>
    %13 = arith.maximumf %11, %12 : vector<8x256xf32>
    %cst_10 = arith.constant 0.000000e+00 : f32
    %14 = vector.broadcast %cst_10 : f32 to vector<1x32xf32>
    %cst_11 = arith.constant 0.000000e+00 : f32
    %15 = vector.broadcast %cst_11 : f32 to vector<1x32xf32>
    %c0_12 = arith.constant 0 : index
    %c0_13 = arith.constant 0 : index
    %c0_14 = arith.constant 0 : index
    %16 = vector.load %arg5[%c0_12, %c0_13, %c0_14] : memref<8x256x32xf32, #tpu.memory_space<vmem>>, vector<1x256x32xf32>
    %17 = vector.shape_cast %16 : vector<1x256x32xf32> to vector<256x32xf32>
    %18 = vector.extract_strided_slice %7 {offsets = [0, 0], sizes = [1, 256], strides = [1, 1]} : vector<8x256xf32> to vector<1x256xf32>
    %cst_15 = arith.constant dense<0.000000e+00> : vector<1x32xf32>
    %19 = tpu.matmul %18, %17, %cst_15 {dimension_numbers = #tpu.dot_dimension_numbers<[1], [0], [0], [1], [0, 0, 1, 1], [], []>} : vector<1x256xf32>, vector<256x32xf32>, vector<1x32xf32> -> vector<1x32xf32>
    %20 = arith.addf %14, %19 : vector<1x32xf32>
    %21 = vector.extract_strided_slice %13 {offsets = [0, 0], sizes = [1, 256], strides = [1, 1]} : vector<8x256xf32> to vector<1x256xf32>
    %cst_16 = arith.constant dense<0.000000e+00> : vector<1x32xf32>
    %22 = tpu.matmul %21, %17, %cst_16 {dimension_numbers = #tpu.dot_dimension_numbers<[1], [0], [0], [1], [0, 0, 1, 1], [], []>} : vector<1x256xf32>, vector<256x32xf32>, vector<1x32xf32> -> vector<1x32xf32>
    %23 = arith.addf %15, %22 : vector<1x32xf32>
    %c1 = arith.constant 1 : index
    %c0_17 = arith.constant 0 : index
    %c0_18 = arith.constant 0 : index
    %24 = vector.load %arg5[%c1, %c0_17, %c0_18] : memref<8x256x32xf32, #tpu.memory_space<vmem>>, vector<1x256x32xf32>
    %25 = vector.shape_cast %24 : vector<1x256x32xf32> to vector<256x32xf32>
    %26 = vector.extract_strided_slice %7 {offsets = [1, 0], sizes = [1, 256], strides = [1, 1]} : vector<8x256xf32> to vector<1x256xf32>
    %cst_19 = arith.constant dense<0.000000e+00> : vector<1x32xf32>
    %27 = tpu.matmul %26, %25, %cst_19 {dimension_numbers = #tpu.dot_dimension_numbers<[1], [0], [0], [1], [0, 0, 1, 1], [], []>} : vector<1x256xf32>, vector<256x32xf32>, vector<1x32xf32> -> vector<1x32xf32>
    %28 = arith.addf %20, %27 : vector<1x32xf32>
    %29 = vector.extract_strided_slice %13 {offsets = [1, 0], sizes = [1, 256], strides = [1, 1]} : vector<8x256xf32> to vector<1x256xf32>
    %cst_20 = arith.constant dense<0.000000e+00> : vector<1x32xf32>
    %30 = tpu.matmul %29, %25, %cst_20 {dimension_numbers = #tpu.dot_dimension_numbers<[1], [0], [0], [1], [0, 0, 1, 1], [], []>} : vector<1x256xf32>, vector<256x32xf32>, vector<1x32xf32> -> vector<1x32xf32>
    %31 = arith.addf %23, %30 : vector<1x32xf32>
    %c2 = arith.constant 2 : index
    %c0_21 = arith.constant 0 : index
    %c0_22 = arith.constant 0 : index
    %32 = vector.load %arg5[%c2, %c0_21, %c0_22] : memref<8x256x32xf32, #tpu.memory_space<vmem>>, vector<1x256x32xf32>
    %33 = vector.shape_cast %32 : vector<1x256x32xf32> to vector<256x32xf32>
    %34 = vector.extract_strided_slice %7 {offsets = [2, 0], sizes = [1, 256], strides = [1, 1]} : vector<8x256xf32> to vector<1x256xf32>
    %cst_23 = arith.constant dense<0.000000e+00> : vector<1x32xf32>
    %35 = tpu.matmul %34, %33, %cst_23 {dimension_numbers = #tpu.dot_dimension_numbers<[1], [0], [0], [1], [0, 0, 1, 1], [], []>} : vector<1x256xf32>, vector<256x32xf32>, vector<1x32xf32> -> vector<1x32xf32>
    %36 = arith.addf %28, %35 : vector<1x32xf32>
    %37 = vector.extract_strided_slice %13 {offsets = [2, 0], sizes = [1, 256], strides = [1, 1]} : vector<8x256xf32> to vector<1x256xf32>
    %cst_24 = arith.constant dense<0.000000e+00> : vector<1x32xf32>
    %38 = tpu.matmul %37, %33, %cst_24 {dimension_numbers = #tpu.dot_dimension_numbers<[1], [0], [0], [1], [0, 0, 1, 1], [], []>} : vector<1x256xf32>, vector<256x32xf32>, vector<1x32xf32> -> vector<1x32xf32>
    %39 = arith.addf %31, %38 : vector<1x32xf32>
    %c3 = arith.constant 3 : index
    %c0_25 = arith.constant 0 : index
    %c0_26 = arith.constant 0 : index
    %40 = vector.load %arg5[%c3, %c0_25, %c0_26] : memref<8x256x32xf32, #tpu.memory_space<vmem>>, vector<1x256x32xf32>
    %41 = vector.shape_cast %40 : vector<1x256x32xf32> to vector<256x32xf32>
    %42 = vector.extract_strided_slice %7 {offsets = [3, 0], sizes = [1, 256], strides = [1, 1]} : vector<8x256xf32> to vector<1x256xf32>
    %cst_27 = arith.constant dense<0.000000e+00> : vector<1x32xf32>
    %43 = tpu.matmul %42, %41, %cst_27 {dimension_numbers = #tpu.dot_dimension_numbers<[1], [0], [0], [1], [0, 0, 1, 1], [], []>} : vector<1x256xf32>, vector<256x32xf32>, vector<1x32xf32> -> vector<1x32xf32>
    %44 = arith.addf %36, %43 : vector<1x32xf32>
    %45 = vector.extract_strided_slice %13 {offsets = [3, 0], sizes = [1, 256], strides = [1, 1]} : vector<8x256xf32> to vector<1x256xf32>
    %cst_28 = arith.constant dense<0.000000e+00> : vector<1x32xf32>
    %46 = tpu.matmul %45, %41, %cst_28 {dimension_numbers = #tpu.dot_dimension_numbers<[1], [0], [0], [1], [0, 0, 1, 1], [], []>} : vector<1x256xf32>, vector<256x32xf32>, vector<1x32xf32> -> vector<1x32xf32>
    %47 = arith.addf %39, %46 : vector<1x32xf32>
    %c4 = arith.constant 4 : index
    %c0_29 = arith.constant 0 : index
    %c0_30 = arith.constant 0 : index
    %48 = vector.load %arg5[%c4, %c0_29, %c0_30] : memref<8x256x32xf32, #tpu.memory_space<vmem>>, vector<1x256x32xf32>
    %49 = vector.shape_cast %48 : vector<1x256x32xf32> to vector<256x32xf32>
    %50 = vector.extract_strided_slice %7 {offsets = [4, 0], sizes = [1, 256], strides = [1, 1]} : vector<8x256xf32> to vector<1x256xf32>
    %cst_31 = arith.constant dense<0.000000e+00> : vector<1x32xf32>
    %51 = tpu.matmul %50, %49, %cst_31 {dimension_numbers = #tpu.dot_dimension_numbers<[1], [0], [0], [1], [0, 0, 1, 1], [], []>} : vector<1x256xf32>, vector<256x32xf32>, vector<1x32xf32> -> vector<1x32xf32>
    %52 = arith.addf %44, %51 : vector<1x32xf32>
    %53 = vector.extract_strided_slice %13 {offsets = [4, 0], sizes = [1, 256], strides = [1, 1]} : vector<8x256xf32> to vector<1x256xf32>
    %cst_32 = arith.constant dense<0.000000e+00> : vector<1x32xf32>
    %54 = tpu.matmul %53, %49, %cst_32 {dimension_numbers = #tpu.dot_dimension_numbers<[1], [0], [0], [1], [0, 0, 1, 1], [], []>} : vector<1x256xf32>, vector<256x32xf32>, vector<1x32xf32> -> vector<1x32xf32>
    %55 = arith.addf %47, %54 : vector<1x32xf32>
    %c5 = arith.constant 5 : index
    %c0_33 = arith.constant 0 : index
    %c0_34 = arith.constant 0 : index
    %56 = vector.load %arg5[%c5, %c0_33, %c0_34] : memref<8x256x32xf32, #tpu.memory_space<vmem>>, vector<1x256x32xf32>
    %57 = vector.shape_cast %56 : vector<1x256x32xf32> to vector<256x32xf32>
    %58 = vector.extract_strided_slice %7 {offsets = [5, 0], sizes = [1, 256], strides = [1, 1]} : vector<8x256xf32> to vector<1x256xf32>
    %cst_35 = arith.constant dense<0.000000e+00> : vector<1x32xf32>
    %59 = tpu.matmul %58, %57, %cst_35 {dimension_numbers = #tpu.dot_dimension_numbers<[1], [0], [0], [1], [0, 0, 1, 1], [], []>} : vector<1x256xf32>, vector<256x32xf32>, vector<1x32xf32> -> vector<1x32xf32>
    %60 = arith.addf %52, %59 : vector<1x32xf32>
    %61 = vector.extract_strided_slice %13 {offsets = [5, 0], sizes = [1, 256], strides = [1, 1]} : vector<8x256xf32> to vector<1x256xf32>
    %cst_36 = arith.constant dense<0.000000e+00> : vector<1x32xf32>
    %62 = tpu.matmul %61, %57, %cst_36 {dimension_numbers = #tpu.dot_dimension_numbers<[1], [0], [0], [1], [0, 0, 1, 1], [], []>} : vector<1x256xf32>, vector<256x32xf32>, vector<1x32xf32> -> vector<1x32xf32>
    %63 = arith.addf %55, %62 : vector<1x32xf32>
    %c6 = arith.constant 6 : index
    %c0_37 = arith.constant 0 : index
    %c0_38 = arith.constant 0 : index
    %64 = vector.load %arg5[%c6, %c0_37, %c0_38] : memref<8x256x32xf32, #tpu.memory_space<vmem>>, vector<1x256x32xf32>
    %65 = vector.shape_cast %64 : vector<1x256x32xf32> to vector<256x32xf32>
    %66 = vector.extract_strided_slice %7 {offsets = [6, 0], sizes = [1, 256], strides = [1, 1]} : vector<8x256xf32> to vector<1x256xf32>
    %cst_39 = arith.constant dense<0.000000e+00> : vector<1x32xf32>
    %67 = tpu.matmul %66, %65, %cst_39 {dimension_numbers = #tpu.dot_dimension_numbers<[1], [0], [0], [1], [0, 0, 1, 1], [], []>} : vector<1x256xf32>, vector<256x32xf32>, vector<1x32xf32> -> vector<1x32xf32>
    %68 = arith.addf %60, %67 : vector<1x32xf32>
    %69 = vector.extract_strided_slice %13 {offsets = [6, 0], sizes = [1, 256], strides = [1, 1]} : vector<8x256xf32> to vector<1x256xf32>
    %cst_40 = arith.constant dense<0.000000e+00> : vector<1x32xf32>
    %70 = tpu.matmul %69, %65, %cst_40 {dimension_numbers = #tpu.dot_dimension_numbers<[1], [0], [0], [1], [0, 0, 1, 1], [], []>} : vector<1x256xf32>, vector<256x32xf32>, vector<1x32xf32> -> vector<1x32xf32>
    %71 = arith.addf %63, %70 : vector<1x32xf32>
    %c7 = arith.constant 7 : index
    %c0_41 = arith.constant 0 : index
    %c0_42 = arith.constant 0 : index
    %72 = vector.load %arg5[%c7, %c0_41, %c0_42] : memref<8x256x32xf32, #tpu.memory_space<vmem>>, vector<1x256x32xf32>
    %73 = vector.shape_cast %72 : vector<1x256x32xf32> to vector<256x32xf32>
    %74 = vector.extract_strided_slice %7 {offsets = [7, 0], sizes = [1, 256], strides = [1, 1]} : vector<8x256xf32> to vector<1x256xf32>
    %cst_43 = arith.constant dense<0.000000e+00> : vector<1x32xf32>
    %75 = tpu.matmul %74, %73, %cst_43 {dimension_numbers = #tpu.dot_dimension_numbers<[1], [0], [0], [1], [0, 0, 1, 1], [], []>} : vector<1x256xf32>, vector<256x32xf32>, vector<1x32xf32> -> vector<1x32xf32>
    %76 = arith.addf %68, %75 : vector<1x32xf32>
    %77 = vector.extract_strided_slice %13 {offsets = [7, 0], sizes = [1, 256], strides = [1, 1]} : vector<8x256xf32> to vector<1x256xf32>
    %cst_44 = arith.constant dense<0.000000e+00> : vector<1x32xf32>
    %78 = tpu.matmul %77, %73, %cst_44 {dimension_numbers = #tpu.dot_dimension_numbers<[1], [0], [0], [1], [0, 0, 1, 1], [], []>} : vector<1x256xf32>, vector<256x32xf32>, vector<1x32xf32> -> vector<1x32xf32>
    %79 = arith.addf %71, %78 : vector<1x32xf32>
    %80 = tpu.concatenate %76, %79 in 0 : vector<1x32xf32>, vector<1x32xf32> -> vector<2x32xf32>
    %c0_45 = arith.constant 0 : index
    %c0_46 = arith.constant 0 : index
    %81 = vector.load %arg6[%c0_45, %c0_46] : memref<1x32xf32, #tpu.memory_space<vmem>>, vector<1x32xf32>
    %82 = vector.broadcast %81 : vector<1x32xf32> to vector<2x32xf32>
    %83 = arith.addf %80, %82 : vector<2x32xf32>
    %cst_47 = arith.constant 0.000000e+00 : f32
    %84 = vector.broadcast %cst_47 : f32 to vector<2x32xf32>
    %85 = arith.maximumf %83, %84 : vector<2x32xf32>
    %c0_48 = arith.constant 0 : index
    %c0_49 = arith.constant 0 : index
    %86 = vector.load %arg7[%c0_48, %c0_49] : memref<2x32xf32, #tpu.memory_space<vmem>>, vector<2x32xf32>
    %87 = arith.mulf %85, %86 : vector<2x32xf32>
    %cst_50 = arith.constant dense<0.000000e+00> : vector<2xf32>
    %88 = vector.multi_reduction <add>, %87, %cst_50 [1] : vector<2x32xf32> to vector<2xf32>
    %89 = vector.shape_cast %88 : vector<2xf32> to vector<2x1xf32>
    %cst_51 = arith.constant dense<0.000000e+00> : vector<1xf32>
    %90 = vector.multi_reduction <add>, %89, %cst_51 [0] : vector<2x1xf32> to vector<1xf32>
    %91 = vector.shape_cast %90 : vector<1xf32> to vector<1x1xf32>
    %c0_52 = arith.constant 0 : index
    %c0_53 = arith.constant 0 : index
    %92 = vector.load %arg8[%c0_52, %c0_53] : memref<1x1xf32, #tpu.memory_space<vmem>>, vector<1x1xf32>
    %93 = arith.addf %91, %92 : vector<1x1xf32>
    %94 = arith.negf %93 : vector<1x1xf32>
    %95 = math.exp %94 : vector<1x1xf32>
    %cst_54 = arith.constant 1.000000e+00 : f32
    %96 = vector.broadcast %cst_54 : f32 to vector<1x1xf32>
    %97 = arith.addf %96, %95 : vector<1x1xf32>
    %98 = arith.divf %96, %97 : vector<1x1xf32>
    %c0_55 = arith.constant 0 : index
    %c0_56 = arith.constant 0 : index
    %99 = vector.load %arg9[%c0_55, %c0_56] : memref<1x1xf32, #tpu.memory_space<vmem>>, vector<1x1xf32>
    tpu.vector_store %arg9[%c0_55, %c0_56], %98 {strides = array<i32>} : memref<1x1xf32, #tpu.memory_space<vmem>>, vector<1x1xf32>,
    return
  }
  func.func @transform_0(%arg0: i32) -> (i32, i32) {
    %c0_i32 = arith.constant 0 : i32
    %c0_i32_0 = arith.constant 0 : i32
    %c0_i32_1 = arith.constant 0 : i32
    return %c0_i32, %c0_i32_0 : i32, i32
  }
  func.func @transform_1(%arg0: i32) -> (i32, i32) {
    %c0_i32 = arith.constant 0 : i32
    %c0_i32_0 = arith.constant 0 : i32
    %c0_i32_1 = arith.constant 0 : i32
    return %c0_i32, %c0_i32_0 : i32, i32
  }
  func.func @transform_2(%arg0: i32) -> (i32, i32) {
    %c0_i32 = arith.constant 0 : i32
    %c0_i32_0 = arith.constant 0 : i32
    %c0_i32_1 = arith.constant 0 : i32
    return %c0_i32, %c0_i32_0 : i32, i32
  }
  func.func @transform_3(%arg0: i32) -> (i32, i32) {
    %c0_i32 = arith.constant 0 : i32
    %c0_i32_0 = arith.constant 0 : i32
    %c0_i32_1 = arith.constant 0 : i32
    return %c0_i32, %c0_i32_0 : i32, i32
  }
  func.func @transform_4(%arg0: i32) -> (i32, i32, i32) {
    %c0_i32 = arith.constant 0 : i32
    %c0_i32_0 = arith.constant 0 : i32
    %c0_i32_1 = arith.constant 0 : i32
    %c0_i32_2 = arith.constant 0 : i32
    return %c0_i32, %c0_i32_0, %c0_i32_1 : i32, i32, i32
  }
  func.func @transform_5(%arg0: i32) -> (i32, i32) {
    %c0_i32 = arith.constant 0 : i32
    %c0_i32_0 = arith.constant 0 : i32
    %c0_i32_1 = arith.constant 0 : i32
    return %c0_i32, %c0_i32_0 : i32, i32
  }
  func.func @transform_6(%arg0: i32) -> (i32, i32) {
    %c0_i32 = arith.constant 0 : i32
    %c0_i32_0 = arith.constant 0 : i32
    %c0_i32_1 = arith.constant 0 : i32
    return %c0_i32, %c0_i32_0 : i32, i32
  }
  func.func @transform_7(%arg0: i32) -> (i32, i32) {
    %c0_i32 = arith.constant 0 : i32
    %c0_i32_0 = arith.constant 0 : i32
    %c0_i32_1 = arith.constant 0 : i32
    return %c0_i32, %c0_i32_0 : i32, i32
  }
  func.func @transform_8(%arg0: i32) -> (i32, i32) {
    %c0_i32 = arith.constant 0 : i32
    %c0_i32_0 = arith.constant 0 : i32
    %c0_i32_1 = arith.constant 0 : i32
    return %c0_i32, %c0_i32_0 : i32, i32
  }
}

</mosaic_0001>

<llo_original>
// kernel: classification_net_forward.1
$region0: #{classification_net_forward.1}
  #allocation0 [shape = 'u32[]', space=smem, size = 0x4, offset = 0x4, fixed_abs, tag = 'smem constant byte address 0x4 - core index']
  #allocation1 [shape = 'u32[144,128]{1,0:T(1,128)}', space=vmem, size = 0x12000, scoped, tag = 'internal scratch']
  #allocation2 [shape = 'f32[1,1]{1,0:T(1,128)S(1)}', space=vmem, size = 0x200, scoped, tag = 'scoped memory for classification_net_forward.1']
  %s0 = inlined_call_operand.vmem [shape: f32[36,256], index: 0, kind: input, shape index: {}]
  %s1 = inlined_call_operand.vmem [shape: f32[36,256], index: 1, kind: input, shape index: {}]
  %s2 = inlined_call_operand.vmem [shape: f32[8,36], index: 2, kind: input, shape index: {}]
  %s3 = inlined_call_operand.vmem [shape: f32[8,1], index: 3, kind: input, shape index: {}]
  %s4 = inlined_call_operand.vmem [shape: f32[8,256,32], index: 4, kind: input, shape index: {}]
  %s5 = inlined_call_operand.vmem [shape: f32[1,32], index: 5, kind: input, shape index: {}]
  %s6 = inlined_call_operand.vmem [shape: f32[2,32], index: 6, kind: input, shape index: {}]
  %s7 = inlined_call_operand.<no memory space> [shape: f32[1,1], index: 7, kind: input, shape index: {}]
  %s8 = inlined_call_operand.hbm [shape: f32[1,1], index: 8, kind: output, shape index: {}]
  %s9 = sld [smem:[#allocation0]]
  $region42: #{classification_net_forward.1} parent=0
    _
  %s11 = ssub.s32 1, %s9
  %s12 = scalar_select 0, %s11, %s9
  %v13 = vstv %s7
  %14 = vst [vmem:[#allocation2] sm:$0x1] %v13
  $region1: #{classification_net_forward.1} parent=0
    #allocation3 [shape = 'u8[512]{0}', space=vmem, size = 0x400, scoped, tag = 'output window, operand 0, single buffered']
    #allocation4 [shape = 's32[1]{0}', space=sflag, size = 0x4, scoped, tag = 'scoped memory for classification_net_forward.1']
    %15 = vsyncpa [#allocation4], 0
    // Predicated region
    $region2: #{classification_net_forward.1} parent=1 // pred_check
      _
    $region3: #{classification_net_forward.1} parent=1 // pred_check_branch
      %17 = sbr.rel (0) target = $region5
    $region4: #{classification_net_forward.1} parent=1 // pred_region
      _
    $region5: #{classification_net_forward.1} parent=1 // pred_fallthru
      _
    // Predicated region
    $region6: #{classification_net_forward.1} parent=1 // pred_check
      _
    $region7: #{classification_net_forward.1} parent=1 // pred_check_branch
      %19 = sbr.rel (0) target = $region9
    $region8: #{classification_net_forward.1} parent=1 // pred_region
      _
    $region9: #{classification_net_forward.1} parent=1 // pred_fallthru
      _
    // Predicated region
    $region10: #{classification_net_forward.1} parent=1 // pred_check
      _
    $region11: #{classification_net_forward.1} parent=1 // pred_check_branch
      %21 = sbr.rel (0) target = $region13
    $region12: #{classification_net_forward.1} parent=1 // pred_region
      _
    $region13: #{classification_net_forward.1} parent=1 // pred_fallthru
      _
    // Predicated region
    $region14: #{classification_net_forward.1} parent=1 // pred_check
      _
    $region15: #{classification_net_forward.1} parent=1 // pred_check_branch
      %23 = sbr.rel (0) target = $region17
    $region16: #{classification_net_forward.1} parent=1 // pred_region
      _
    $region17: #{classification_net_forward.1} parent=1 // pred_fallthru
      _
    // Predicated region
    $region18: #{classification_net_forward.1} parent=1 // pred_check
      _
    $region19: #{classification_net_forward.1} parent=1 // pred_check_branch
      %25 = sbr.rel (0) target = $region21
    $region20: #{classification_net_forward.1} parent=1 // pred_region
      _
    $region21: #{classification_net_forward.1} parent=1 // pred_fallthru
      _
    // Predicated region
    $region22: #{classification_net_forward.1} parent=1 // pred_check
      _
    $region23: #{classification_net_forward.1} parent=1 // pred_check_branch
      %27 = sbr.rel (0) target = $region25
    $region24: #{classification_net_forward.1} parent=1 // pred_region
      _
    $region25: #{classification_net_forward.1} parent=1 // pred_fallthru
      _
    // Predicated region
    $region26: #{classification_net_forward.1} parent=1 // pred_check
      _
    $region27: #{classification_net_forward.1} parent=1 // pred_check_branch
      %29 = sbr.rel (0) target = $region29
    $region28: #{classification_net_forward.1} parent=1 // pred_region
      _
    $region29: #{classification_net_forward.1} parent=1 // pred_fallthru
      _
    // Predicated region
    $region30: #{classification_net_forward.1} parent=1 // pred_check
      _
    $region31: #{classification_net_forward.1} parent=1 // pred_check_branch
      %31 = sbr.rel (0) target = $region33
    $region32: #{classification_net_forward.1} parent=1 // pred_region
      _
    $region33: #{classification_net_forward.1} parent=1 // pred_fallthru
      _
    %v32 = vld [vmem:[%s2] sm:$0xff]
    %v33 = vld [vmem:[%s3] sm:$0xff]
    %v34 = vld [vmem:[%s0] sm:$0xff]
    %v35 = vld [vmem:[%s0 + $0x8] sm:$0xff]
    %v36 = vld [vmem:[%s0 + $0x10] sm:$0xff]
    %v37 = vld [vmem:[%s0 + $0x18] sm:$0xff]
    %v38 = vld [vmem:[%s0 + $0x20] sm:$0xff]
    %v39 = vld [vmem:[%s0 + $0x28] sm:$0xff]
    %v40 = vld [vmem:[%s0 + $0x30] sm:$0xff]
    %v41 = vld [vmem:[%s0 + $0x38] sm:$0xff]
    %v42 = vld [vmem:[%s0 + $0x40] sm:$0xf]
    %v43 = vld [vmem:[%s0 + $0x48] sm:$0xf]
    %45 = vset.pattern.permute.xlu0 0
    %46 = vperm.xlu0 %45, %v33
    %v47 = vpop.permute.xlu0 %46
    %vm49 = vcmask 293888
    %v51 = vsel %vm49, %v32, 0
    %vm53 = vcmask 1043456
    %v55 = vsel %vm53, %v42, 0
    %v58 = vsel %vm53, %v43, 0
    %60 = vmatprep.subr.mxu0 0.0
    %61 = vmatpush1.msra.mxu0 0.0
    %62 = vmatprep.subr.mxu0 0.0
    %63 = vmatpush1.msra.mxu0 0.0
    %64 = vmatprep.subr.mxu0 0.0
    %65 = vmatpush1.msra.mxu0 0.0
    %66 = vmatprep.subr.mxu0 0.0
    %67 = vmatpush1.msra.mxu0 0.0
    %68 = vmatprep.subr.mxu0 0.0
    %69 = vmatpush1.msra.mxu0 0.0
    %70 = vmatprep.subr.mxu0 0.0
    %71 = vmatpush1.msra.mxu0 0.0
    %72 = vmatprep.subr.mxu0 0.0
    %73 = vmatpush1.msra.mxu0 0.0
    %74 = vmatprep.subr.mxu0 0.0
    %75 = vmatpush1.msra.mxu0 0.0
    %76 = vmatprep.subr.mxu0 0.0
    %77 = vmatpush1.msra.mxu0 0.0
    %78 = vmatprep.subr.mxu0 0.0
    %79 = vmatpush1.msra.mxu0 0.0
    %80 = vmatprep.subr.mxu0 0.0
    %81 = vmatpush1.msra.mxu0 0.0
    %82 = vmatprep.subr.mxu0 %v58
    %83 = vmatpush1.msra.mxu0 %v55
    %84 = vmatprep.subr.mxu0 %v41
    %85 = vmatpush1.msra.mxu0 %v40
    %86 = vmatprep.subr.mxu0 %v39
    %87 = vmatpush1.msra.mxu0 %v38
    %88 = vmatprep.subr.mxu0 %v37
    %89 = vmatpush1.msra.mxu0 %v36
    %90 = vmatprep.subr.mxu0 %v35
    %91 = vmatpush1.msra.mxu0 %v34
    %92 = vmatprep.subr.mxu0 0.0
    %93 = vmatpush2.msra.mxu0 0.0
    %94 = vmatprep.subr.mxu0 0.0
    %95 = vmatpush2.msra.mxu0 0.0
    %96 = vmatprep.subr.mxu0 0.0
    %97 = vmatpush2.msra.mxu0 0.0
    %98 = vmatprep.subr.mxu0 0.0
    %99 = vmatpush2.msra.mxu0 0.0
    %100 = vmatprep.subr.mxu0 0.0
    %101 = vmatpush2.msra.mxu0 0.0
    %102 = vmatprep.subr.mxu0 0.0
    %103 = vmatpush2.msra.mxu0 0.0
    %104 = vmatprep.subr.mxu0 0.0
    %105 = vmatpush2.msra.mxu0 0.0
    %106 = vmatprep.subr.mxu0 0.0
    %107 = vmatpush2.msra.mxu0 0.0
    %108 = vmatprep.subr.mxu0 0.0
    %109 = vmatpush2.msra.mxu0 0.0
    %110 = vmatprep.subr.mxu0 0.0
    %111 = vmatpush2.msra.mxu0 0.0
    %112 = vmatprep.subr.mxu0 0.0
    %113 = vmatpush2.msra.mxu0 0.0
    %114 = vmatprep.subr.mxu0 0.0
    %115 = vmatpush2.msra.mxu0 0.0
    %116 = vmatprep.subr.mxu0 0.0
    %117 = vmatpush2.msra.mxu0 0.0
    %118 = vmatprep.subr.mxu0 0.0
    %119 = vmatpush2.msra.mxu0 0.0
    %120 = vmatprep.subr.mxu0 0.0
    %121 = vmatpush2.msra.mxu0 0.0
    %122 = vmatprep.subr.mxu0 0.0
    %123 = vmatpush2.msra.mxu0 0.0
    %124 = vmatprep.mubr.f32.mxu0 0.0
    %125 = vmatmul.mubr.f32.gmra.mxu0 %v51
    %v126 = vpop.f32.mrf.mxu0
    %v127 = vadd.f32 %v47, %v126
    %v128 = vpop.f32.mrf.mxu0
    %v129 = vadd.f32 %v47, %v128
    %130 = vdwg.mxu0
    %v131 = vmax.f32 %v127, 0.0
    %v132 = vmax.f32 %v129, 0.0
    %v133 = vld [vmem:[%s1] sm:$0xff]
    %v134 = vld [vmem:[%s1 + $0x8] sm:$0xff]
    %v135 = vld [vmem:[%s1 + $0x10] sm:$0xff]
    %v136 = vld [vmem:[%s1 + $0x18] sm:$0xff]
    %v137 = vld [vmem:[%s1 + $0x20] sm:$0xff]
    %v138 = vld [vmem:[%s1 + $0x28] sm:$0xff]
    %v139 = vld [vmem:[%s1 + $0x30] sm:$0xff]
    %v140 = vld [vmem:[%s1 + $0x38] sm:$0xff]
    %v141 = vld [vmem:[%s1 + $0x40] sm:$0xf]
    %v142 = vld [vmem:[%s1 + $0x48] sm:$0xf]
    %v144 = vsel %vm53, %v141, 0
    %v147 = vsel %vm53, %v142, 0
    %149 = vmatprep.subr.mxu0 0.0
    %150 = vmatpush1.msra.mxu0 0.0
    %151 = vmatprep.subr.mxu0 0.0
    %152 = vmatpush1.msra.mxu0 0.0
    %153 = vmatprep.subr.mxu0 0.0
    %154 = vmatpush1.msra.mxu0 0.0
    %155 = vmatprep.subr.mxu0 0.0
    %156 = vmatpush1.msra.mxu0 0.0
    %157 = vmatprep.subr.mxu0 0.0
    %158 = vmatpush1.msra.mxu0 0.0
    %159 = vmatprep.subr.mxu0 0.0
    %160 = vmatpush1.msra.mxu0 0.0
    %161 = vmatprep.subr.mxu0 0.0
    %162 = vmatpush1.msra.mxu0 0.0
    %163 = vmatprep.subr.mxu0 0.0
    %164 = vmatpush1.msra.mxu0 0.0
    %165 = vmatprep.subr.mxu0 0.0
    %166 = vmatpush1.msra.mxu0 0.0
    %167 = vmatprep.subr.mxu0 0.0
    %168 = vmatpush1.msra.mxu0 0.0
    %169 = vmatprep.subr.mxu0 0.0
    %170 = vmatpush1.msra.mxu0 0.0
    %171 = vmatprep.subr.mxu0 %v147
    %172 = vmatpush1.msra.mxu0 %v144
    %173 = vmatprep.subr.mxu0 %v140
    %174 = vmatpush1.msra.mxu0 %v139
    %175 = vmatprep.subr.mxu0 %v138
    %176 = vmatpush1.msra.mxu0 %v137
    %177 = vmatprep.subr.mxu0 %v136
    %178 = vmatpush1.msra.mxu0 %v135
    %179 = vmatprep.subr.mxu0 %v134
    %180 = vmatpush1.msra.mxu0 %v133
    %181 = vmatprep.subr.mxu0 0.0
    %182 = vmatpush2.msra.mxu0 0.0
    %183 = vmatprep.subr.mxu0 0.0
    %184 = vmatpush2.msra.mxu0 0.0
    %185 = vmatprep.subr.mxu0 0.0
    %186 = vmatpush2.msra.mxu0 0.0
    %187 = vmatprep.subr.mxu0 0.0
    %188 = vmatpush2.msra.mxu0 0.0
    %189 = vmatprep.subr.mxu0 0.0
    %190 = vmatpush2.msra.mxu0 0.0
    %191 = vmatprep.subr.mxu0 0.0
    %192 = vmatpush2.msra.mxu0 0.0
    %193 = vmatprep.subr.mxu0 0.0
    %194 = vmatpush2.msra.mxu0 0.0
    %195 = vmatprep.subr.mxu0 0.0
    %196 = vmatpush2.msra.mxu0 0.0
    %197 = vmatprep.subr.mxu0 0.0
    %198 = vmatpush2.msra.mxu0 0.0
    %199 = vmatprep.subr.mxu0 0.0
    %200 = vmatpush2.msra.mxu0 0.0
    %201 = vmatprep.subr.mxu0 0.0
    %202 = vmatpush2.msra.mxu0 0.0
    %203 = vmatprep.subr.mxu0 0.0
    %204 = vmatpush2.msra.mxu0 0.0
    %205 = vmatprep.subr.mxu0 0.0
    %206 = vmatpush2.msra.mxu0 0.0
    %207 = vmatprep.subr.mxu0 0.0
    %208 = vmatpush2.msra.mxu0 0.0
    %209 = vmatprep.subr.mxu0 0.0
    %210 = vmatpush2.msra.mxu0 0.0
    %211 = vmatprep.subr.mxu0 0.0
    %212 = vmatpush2.msra.mxu0 0.0
    %213 = vmatprep.mubr.f32.mxu0 0.0
    %214 = vmatmul.mubr.f32.gmra.mxu0 %v51
    %v215 = vpop.f32.mrf.mxu0
    %v216 = vadd.f32 %v47, %v215
    %v217 = vpop.f32.mrf.mxu0
    %v218 = vadd.f32 %v47, %v217
    %219 = vdwg.mxu0
    %v220 = vmax.f32 %v216, 0.0
    %v221 = vmax.f32 %v218, 0.0
    %v222 = vld [vmem:[%s4] sm:$0xff]
    %v223 = vld [vmem:[%s4 + $0x8] sm:$0xff]
    %v224 = vld [vmem:[%s4 + $0x10] sm:$0xff]
    %v225 = vld [vmem:[%s4 + $0x18] sm:$0xff]
    %v226 = vld [vmem:[%s4 + $0x20] sm:$0xff]
    %v227 = vld [vmem:[%s4 + $0x28] sm:$0xff]
    %v228 = vld [vmem:[%s4 + $0x30] sm:$0xff]
    %v229 = vld [vmem:[%s4 + $0x38] sm:$0xff]
    %v230 = vld [vmem:[%s4 + $0x40] sm:$0xff]
    %v231 = vld [vmem:[%s4 + $0x48] sm:$0xff]
    %v232 = vld [vmem:[%s4 + $0x50] sm:$0xff]
    %v233 = vld [vmem:[%s4 + $0x58] sm:$0xff]
    %v234 = vld [vmem:[%s4 + $0x60] sm:$0xff]
    %v235 = vld [vmem:[%s4 + $0x68] sm:$0xff]
    %v236 = vld [vmem:[%s4 + $0x70] sm:$0xff]
    %v237 = vld [vmem:[%s4 + $0x78] sm:$0xff]
    %v238 = vld [vmem:[%s4 + $0x80] sm:$0xff]
    %v239 = vld [vmem:[%s4 + $0x88] sm:$0xff]
    %v240 = vld [vmem:[%s4 + $0x90] sm:$0xff]
    %v241 = vld [vmem:[%s4 + $0x98] sm:$0xff]
    %v242 = vld [vmem:[%s4 + $0xa0] sm:$0xff]
    %v243 = vld [vmem:[%s4 + $0xa8] sm:$0xff]
    %v244 = vld [vmem:[%s4 + $0xb0] sm:$0xff]
    %v245 = vld [vmem:[%s4 + $0xb8] sm:$0xff]
    %v246 = vld [vmem:[%s4 + $0xc0] sm:$0xff]
    %v247 = vld [vmem:[%s4 + $0xc8] sm:$0xff]
    %v248 = vld [vmem:[%s4 + $0xd0] sm:$0xff]
    %v249 = vld [vmem:[%s4 + $0xd8] sm:$0xff]
    %v250 = vld [vmem:[%s4 + $0xe0] sm:$0xff]
    %v251 = vld [vmem:[%s4 + $0xe8] sm:$0xff]
    %v252 = vld [vmem:[%s4 + $0xf0] sm:$0xff]
    %v253 = vld [vmem:[%s4 + $0xf8] sm:$0xff]
    %s254 = scalar_lea.vmem %s4, 256
    %v255 = vld [vmem:[%s254] sm:$0xff]
    %v256 = vld [vmem:[%s254 + $0x8] sm:$0xff]
    %v257 = vld [vmem:[%s254 + $0x10] sm:$0xff]
    %v258 = vld [vmem:[%s254 + $0x18] sm:$0xff]
    %v259 = vld [vmem:[%s254 + $0x20] sm:$0xff]
    %v260 = vld [vmem:[%s254 + $0x28] sm:$0xff]
    %v261 = vld [vmem:[%s254 + $0x30] sm:$0xff]
    %v262 = vld [vmem:[%s254 + $0x38] sm:$0xff]
    %v263 = vld [vmem:[%s254 + $0x40] sm:$0xff]
    %v264 = vld [vmem:[%s254 + $0x48] sm:$0xff]
    %v265 = vld [vmem:[%s254 + $0x50] sm:$0xff]
    %v266 = vld [vmem:[%s254 + $0x58] sm:$0xff]
    %v267 = vld [vmem:[%s254 + $0x60] sm:$0xff]
    %v268 = vld [vmem:[%s254 + $0x68] sm:$0xff]
    %v269 = vld [vmem:[%s254 + $0x70] sm:$0xff]
    %v270 = vld [vmem:[%s254 + $0x78] sm:$0xff]
    %v271 = vld [vmem:[%s254 + $0x80] sm:$0xff]
    %v272 = vld [vmem:[%s254 + $0x88] sm:$0xff]
    %v273 = vld [vmem:[%s254 + $0x90] sm:$0xff]
    %v274 = vld [vmem:[%s254 + $0x98] sm:$0xff]
    %v275 = vld [vmem:[%s254 + $0xa0] sm:$0xff]
    %v276 = vld [vmem:[%s254 + $0xa8] sm:$0xff]
    %v277 = vld [vmem:[%s254 + $0xb0] sm:$0xff]
    %v278 = vld [vmem:[%s254 + $0xb8] sm:$0xff]
    %v279 = vld [vmem:[%s254 + $0xc0] sm:$0xff]
    %v280 = vld [vmem:[%s254 + $0xc8] sm:$0xff]
    %v281 = vld [vmem:[%s254 + $0xd0] sm:$0xff]
    %v282 = vld [vmem:[%s254 + $0xd8] sm:$0xff]
    %v283 = vld [vmem:[%s254 + $0xe0] sm:$0xff]
    %v284 = vld [vmem:[%s254 + $0xe8] sm:$0xff]
    %v285 = vld [vmem:[%s254 + $0xf0] sm:$0xff]
    %v286 = vld [vmem:[%s254 + $0xf8] sm:$0xff]
    %v289 = vrot.slane %v131, 1
    %v290 = vrot.slane %v132, 1
    %293 = vmatprep.subr.mxu0 0.0
    %294 = vmatpush1.msra.mxu0 %v270
    %295 = vmatprep.subr.mxu0 0.0
    %296 = vmatpush1.msra.mxu0 %v269
    %297 = vmatprep.subr.mxu0 0.0
    %298 = vmatpush1.msra.mxu0 %v268
    %299 = vmatprep.subr.mxu0 0.0
    %300 = vmatpush1.msra.mxu0 %v267
    %301 = vmatprep.subr.mxu0 0.0
    %302 = vmatpush1.msra.mxu0 %v266
    %303 = vmatprep.subr.mxu0 0.0
    %304 = vmatpush1.msra.mxu0 %v265
    %305 = vmatprep.subr.mxu0 0.0
    %306 = vmatpush1.msra.mxu0 %v264
    %307 = vmatprep.subr.mxu0 0.0
    %308 = vmatpush1.msra.mxu0 %v263
    %309 = vmatprep.subr.mxu0 0.0
    %310 = vmatpush1.msra.mxu0 %v262
    %311 = vmatprep.subr.mxu0 0.0
    %312 = vmatpush1.msra.mxu0 %v261
    %313 = vmatprep.subr.mxu0 0.0
    %314 = vmatpush1.msra.mxu0 %v260
    %315 = vmatprep.subr.mxu0 0.0
    %316 = vmatpush1.msra.mxu0 %v259
    %317 = vmatprep.subr.mxu0 0.0
    %318 = vmatpush1.msra.mxu0 %v258
    %319 = vmatprep.subr.mxu0 0.0
    %320 = vmatpush1.msra.mxu0 %v257
    %321 = vmatprep.subr.mxu0 0.0
    %322 = vmatpush1.msra.mxu0 %v256
    %323 = vmatprep.subr.mxu0 0.0
    %324 = vmatpush1.msra.mxu0 %v255
    %325 = vmatprep.subr.mxu0 0.0
    %326 = vmatpush2.msra.mxu0 %v286
    %327 = vmatprep.subr.mxu0 0.0
    %328 = vmatpush2.msra.mxu0 %v285
    %329 = vmatprep.subr.mxu0 0.0
    %330 = vmatpush2.msra.mxu0 %v284
    %331 = vmatprep.subr.mxu0 0.0
    %332 = vmatpush2.msra.mxu0 %v283
    %333 = vmatprep.subr.mxu0 0.0
    %334 = vmatpush2.msra.mxu0 %v282
    %335 = vmatprep.subr.mxu0 0.0
    %336 = vmatpush2.msra.mxu0 %v281
    %337 = vmatprep.subr.mxu0 0.0
    %338 = vmatpush2.msra.mxu0 %v280
    %339 = vmatprep.subr.mxu0 0.0
    %340 = vmatpush2.msra.mxu0 %v279
    %341 = vmatprep.subr.mxu0 0.0
    %342 = vmatpush2.msra.mxu0 %v278
    %343 = vmatprep.subr.mxu0 0.0
    %344 = vmatpush2.msra.mxu0 %v277
    %345 = vmatprep.subr.mxu0 0.0
    %346 = vmatpush2.msra.mxu0 %v276
    %347 = vmatprep.subr.mxu0 0.0
    %348 = vmatpush2.msra.mxu0 %v275
    %349 = vmatprep.subr.mxu0 0.0
    %350 = vmatpush2.msra.mxu0 %v274
    %351 = vmatprep.subr.mxu0 0.0
    %352 = vmatpush2.msra.mxu0 %v273
    %353 = vmatprep.subr.mxu0 0.0
    %354 = vmatpush2.msra.mxu0 %v272
    %355 = vmatprep.subr.mxu0 0.0
    %356 = vmatpush2.msra.mxu0 %v271
    %357 = vmatprep.mubr.f32.mxu0 %v290
    %358 = vmatmul.mubr.f32.gmra.mxu0 %v289
    %v359 = vpop.f32.mrf.mxu0
    %v360 = vadd.f32 0.0, %v359
    %v361 = vpop.f32.mrf.mxu0
    %362 = vdwg.mxu0
    %363 = vmatprep.subr.mxu0 0.0
    %364 = vmatpush1.msra.mxu0 %v237
    %365 = vmatprep.subr.mxu0 0.0
    %366 = vmatpush1.msra.mxu0 %v236
    %367 = vmatprep.subr.mxu0 0.0
    %368 = vmatpush1.msra.mxu0 %v235
    %369 = vmatprep.subr.mxu0 0.0
    %370 = vmatpush1.msra.mxu0 %v234
    %371 = vmatprep.subr.mxu0 0.0
    %372 = vmatpush1.msra.mxu0 %v233
    %373 = vmatprep.subr.mxu0 0.0
    %374 = vmatpush1.msra.mxu0 %v232
    %375 = vmatprep.subr.mxu0 0.0
    %376 = vmatpush1.msra.mxu0 %v231
    %377 = vmatprep.subr.mxu0 0.0
    %378 = vmatpush1.msra.mxu0 %v230
    %379 = vmatprep.subr.mxu0 0.0
    %380 = vmatpush1.msra.mxu0 %v229
    %381 = vmatprep.subr.mxu0 0.0
    %382 = vmatpush1.msra.mxu0 %v228
    %383 = vmatprep.subr.mxu0 0.0
    %384 = vmatpush1.msra.mxu0 %v227
    %385 = vmatprep.subr.mxu0 0.0
    %386 = vmatpush1.msra.mxu0 %v226
    %387 = vmatprep.subr.mxu0 0.0
    %388 = vmatpush1.msra.mxu0 %v225
    %389 = vmatprep.subr.mxu0 0.0
    %390 = vmatpush1.msra.mxu0 %v224
    %391 = vmatprep.subr.mxu0 0.0
    %392 = vmatpush1.msra.mxu0 %v223
    %393 = vmatprep.subr.mxu0 0.0
    %394 = vmatpush1.msra.mxu0 %v222
    %395 = vmatprep.subr.mxu0 0.0
    %396 = vmatpush2.msra.mxu0 %v253
    %397 = vmatprep.subr.mxu0 0.0
    %398 = vmatpush2.msra.mxu0 %v252
    %399 = vmatprep.subr.mxu0 0.0
    %400 = vmatpush2.msra.mxu0 %v251
    %401 = vmatprep.subr.mxu0 0.0
    %402 = vmatpush2.msra.mxu0 %v250
    %403 = vmatprep.subr.mxu0 0.0
    %404 = vmatpush2.msra.mxu0 %v249
    %405 = vmatprep.subr.mxu0 0.0
    %406 = vmatpush2.msra.mxu0 %v248
    %407 = vmatprep.subr.mxu0 0.0
    %408 = vmatpush2.msra.mxu0 %v247
    %409 = vmatprep.subr.mxu0 0.0
    %410 = vmatpush2.msra.mxu0 %v246
    %411 = vmatprep.subr.mxu0 0.0
    %412 = vmatpush2.msra.mxu0 %v245
    %413 = vmatprep.subr.mxu0 0.0
    %414 = vmatpush2.msra.mxu0 %v244
    %415 = vmatprep.subr.mxu0 0.0
    %416 = vmatpush2.msra.mxu0 %v243
    %417 = vmatprep.subr.mxu0 0.0
    %418 = vmatpush2.msra.mxu0 %v242
    %419 = vmatprep.subr.mxu0 0.0
    %420 = vmatpush2.msra.mxu0 %v241
    %421 = vmatprep.subr.mxu0 0.0
    %422 = vmatpush2.msra.mxu0 %v240
    %423 = vmatprep.subr.mxu0 0.0
    %424 = vmatpush2.msra.mxu0 %v239
    %425 = vmatprep.subr.mxu0 0.0
    %426 = vmatpush2.msra.mxu0 %v238
    %427 = vmatprep.mubr.f32.mxu0 %v132
    %428 = vmatmul.mubr.f32.gmra.mxu0 %v131
    %v429 = vpop.f32.mrf.mxu0
    %v430 = vadd.f32 %v360, %v429
    %v431 = vpop.f32.mrf.mxu0
    %432 = vdwg.mxu0
    %v435 = vrot.slane %v220, 1
    %v436 = vrot.slane %v221, 1
    %439 = vmatprep.subr.mxu0 0.0
    %440 = vmatpush1.msra.mxu0 %v270
    %441 = vmatprep.subr.mxu0 0.0
    %442 = vmatpush1.msra.mxu0 %v269
    %443 = vmatprep.subr.mxu0 0.0
    %444 = vmatpush1.msra.mxu0 %v268
    %445 = vmatprep.subr.mxu0 0.0
    %446 = vmatpush1.msra.mxu0 %v267
    %447 = vmatprep.subr.mxu0 0.0
    %448 = vmatpush1.msra.mxu0 %v266
    %449 = vmatprep.subr.mxu0 0.0
    %450 = vmatpush1.msra.mxu0 %v265
    %451 = vmatprep.subr.mxu0 0.0
    %452 = vmatpush1.msra.mxu0 %v264
    %453 = vmatprep.subr.mxu0 0.0
    %454 = vmatpush1.msra.mxu0 %v263
    %455 = vmatprep.subr.mxu0 0.0
    %456 = vmatpush1.msra.mxu0 %v262
    %457 = vmatprep.subr.mxu0 0.0
    %458 = vmatpush1.msra.mxu0 %v261
    %459 = vmatprep.subr.mxu0 0.0
    %460 = vmatpush1.msra.mxu0 %v260
    %461 = vmatprep.subr.mxu0 0.0
    %462 = vmatpush1.msra.mxu0 %v259
    %463 = vmatprep.subr.mxu0 0.0
    %464 = vmatpush1.msra.mxu0 %v258
    %465 = vmatprep.subr.mxu0 0.0
    %466 = vmatpush1.msra.mxu0 %v257
    %467 = vmatprep.subr.mxu0 0.0
    %468 = vmatpush1.msra.mxu0 %v256
    %469 = vmatprep.subr.mxu0 0.0
    %470 = vmatpush1.msra.mxu0 %v255
    %471 = vmatprep.subr.mxu0 0.0
    %472 = vmatpush2.msra.mxu0 %v286
    %473 = vmatprep.subr.mxu0 0.0
    %474 = vmatpush2.msra.mxu0 %v285
    %475 = vmatprep.subr.mxu0 0.0
    %476 = vmatpush2.msra.mxu0 %v284
    %477 = vmatprep.subr.mxu0 0.0
    %478 = vmatpush2.msra.mxu0 %v283
    %479 = vmatprep.subr.mxu0 0.0
    %480 = vmatpush2.msra.mxu0 %v282
    %481 = vmatprep.subr.mxu0 0.0
    %482 = vmatpush2.msra.mxu0 %v281
    %483 = vmatprep.subr.mxu0 0.0
    %484 = vmatpush2.msra.mxu0 %v280
    %485 = vmatprep.subr.mxu0 0.0
    %486 = vmatpush2.msra.mxu0 %v279
    %487 = vmatprep.subr.mxu0 0.0
    %488 = vmatpush2.msra.mxu0 %v278
    %489 = vmatprep.subr.mxu0 0.0
    %490 = vmatpush2.msra.mxu0 %v277
    %491 = vmatprep.subr.mxu0 0.0
    %492 = vmatpush2.msra.mxu0 %v276
    %493 = vmatprep.subr.mxu0 0.0
    %494 = vmatpush2.msra.mxu0 %v275
    %495 = vmatprep.subr.mxu0 0.0
    %496 = vmatpush2.msra.mxu0 %v274
    %497 = vmatprep.subr.mxu0 0.0
    %498 = vmatpush2.msra.mxu0 %v273
    %499 = vmatprep.subr.mxu0 0.0
    %500 = vmatpush2.msra.mxu0 %v272
    %501 = vmatprep.subr.mxu0 0.0
    %502 = vmatpush2.msra.mxu0 %v271
    %503 = vmatprep.mubr.f32.mxu0 %v436
    %504 = vmatmul.mubr.f32.gmra.mxu0 %v435
    %v505 = vpop.f32.mrf.mxu0
    %v506 = vadd.f32 0.0, %v505
    %v507 = vpop.f32.mrf.mxu0
    %508 = vdwg.mxu0
    %509 = vmatprep.subr.mxu0 0.0
    %510 = vmatpush1.msra.mxu0 %v237
    %511 = vmatprep.subr.mxu0 0.0
    %512 = vmatpush1.msra.mxu0 %v236
    %513 = vmatprep.subr.mxu0 0.0
    %514 = vmatpush1.msra.mxu0 %v235
    %515 = vmatprep.subr.mxu0 0.0
    %516 = vmatpush1.msra.mxu0 %v234
    %517 = vmatprep.subr.mxu0 0.0
    %518 = vmatpush1.msra.mxu0 %v233
    %519 = vmatprep.subr.mxu0 0.0
    %520 = vmatpush1.msra.mxu0 %v232
    %521 = vmatprep.subr.mxu0 0.0
    %522 = vmatpush1.msra.mxu0 %v231
    %523 = vmatprep.subr.mxu0 0.0
    %524 = vmatpush1.msra.mxu0 %v230
    %525 = vmatprep.subr.mxu0 0.0
    %526 = vmatpush1.msra.mxu0 %v229
    %527 = vmatprep.subr.mxu0 0.0
    %528 = vmatpush1.msra.mxu0 %v228
    %529 = vmatprep.subr.mxu0 0.0
    %530 = vmatpush1.msra.mxu0 %v227
    %531 = vmatprep.subr.mxu0 0.0
    %532 = vmatpush1.msra.mxu0 %v226
    %533 = vmatprep.subr.mxu0 0.0
    %534 = vmatpush1.msra.mxu0 %v225
    %535 = vmatprep.subr.mxu0 0.0
    %536 = vmatpush1.msra.mxu0 %v224
    %537 = vmatprep.subr.mxu0 0.0
    %538 = vmatpush1.msra.mxu0 %v223
    %539 = vmatprep.subr.mxu0 0.0
    %540 = vmatpush1.msra.mxu0 %v222
    %541 = vmatprep.subr.mxu0 0.0
    %542 = vmatpush2.msra.mxu0 %v253
    %543 = vmatprep.subr.mxu0 0.0
    %544 = vmatpush2.msra.mxu0 %v252
    %545 = vmatprep.subr.mxu0 0.0
    %546 = vmatpush2.msra.mxu0 %v251
    %547 = vmatprep.subr.mxu0 0.0
    %548 = vmatpush2.msra.mxu0 %v250
    %549 = vmatprep.subr.mxu0 0.0
    %550 = vmatpush2.msra.mxu0 %v249
    %551 = vmatprep.subr.mxu0 0.0
    %552 = vmatpush2.msra.mxu0 %v248
    %553 = vmatprep.subr.mxu0 0.0
    %554 = vmatpush2.msra.mxu0 %v247
    %555 = vmatprep.subr.mxu0 0.0
    %556 = vmatpush2.msra.mxu0 %v246
    %557 = vmatprep.subr.mxu0 0.0
    %558 = vmatpush2.msra.mxu0 %v245
    %559 = vmatprep.subr.mxu0 0.0
    %560 = vmatpush2.msra.mxu0 %v244
    %561 = vmatprep.subr.mxu0 0.0
    %562 = vmatpush2.msra.mxu0 %v243
    %563 = vmatprep.subr.mxu0 0.0
    %564 = vmatpush2.msra.mxu0 %v242
    %565 = vmatprep.subr.mxu0 0.0
    %566 = vmatpush2.msra.mxu0 %v241
    %567 = vmatprep.subr.mxu0 0.0
    %568 = vmatpush2.msra.mxu0 %v240
    %569 = vmatprep.subr.mxu0 0.0
    %570 = vmatpush2.msra.mxu0 %v239
    %571 = vmatprep.subr.mxu0 0.0
    %572 = vmatpush2.msra.mxu0 %v238
    %573 = vmatprep.mubr.f32.mxu0 %v221
    %574 = vmatmul.mubr.f32.gmra.mxu0 %v220
    %v575 = vpop.f32.mrf.mxu0
    %v576 = vadd.f32 %v506, %v575
    %v577 = vpop.f32.mrf.mxu0
    %578 = vdwg.mxu0
    %s579 = scalar_lea.vmem %s4, 512
    %v580 = vld [vmem:[%s579] sm:$0xff]
    %v581 = vld [vmem:[%s579 + $0x8] sm:$0xff]
    %v582 = vld [vmem:[%s579 + $0x10] sm:$0xff]
    %v583 = vld [vmem:[%s579 + $0x18] sm:$0xff]
    %v584 = vld [vmem:[%s579 + $0x20] sm:$0xff]
    %v585 = vld [vmem:[%s579 + $0x28] sm:$0xff]
    %v586 = vld [vmem:[%s579 + $0x30] sm:$0xff]
    %v587 = vld [vmem:[%s579 + $0x38] sm:$0xff]
    %v588 = vld [vmem:[%s579 + $0x40] sm:$0xff]
    %v589 = vld [vmem:[%s579 + $0x48] sm:$0xff]
    %v590 = vld [vmem:[%s579 + $0x50] sm:$0xff]
    %v591 = vld [vmem:[%s579 + $0x58] sm:$0xff]
    %v592 = vld [vmem:[%s579 + $0x60] sm:$0xff]
    %v593 = vld [vmem:[%s579 + $0x68] sm:$0xff]
    %v594 = vld [vmem:[%s579 + $0x70] sm:$0xff]
    %v595 = vld [vmem:[%s579 + $0x78] sm:$0xff]
    %v596 = vld [vmem:[%s579 + $0x80] sm:$0xff]
    %v597 = vld [vmem:[%s579 + $0x88] sm:$0xff]
    %v598 = vld [vmem:[%s579 + $0x90] sm:$0xff]
    %v599 = vld [vmem:[%s579 + $0x98] sm:$0xff]
    %v600 = vld [vmem:[%s579 + $0xa0] sm:$0xff]
    %v601 = vld [vmem:[%s579 + $0xa8] sm:$0xff]
    %v602 = vld [vmem:[%s579 + $0xb0] sm:$0xff]
    %v603 = vld [vmem:[%s579 + $0xb8] sm:$0xff]
    %v604 = vld [vmem:[%s579 + $0xc0] sm:$0xff]
    %v605 = vld [vmem:[%s579 + $0xc8] sm:$0xff]
    %v606 = vld [vmem:[%s579 + $0xd0] sm:$0xff]
    %v607 = vld [vmem:[%s579 + $0xd8] sm:$0xff]
    %v608 = vld [vmem:[%s579 + $0xe0] sm:$0xff]
    %v609 = vld [vmem:[%s579 + $0xe8] sm:$0xff]
    %v610 = vld [vmem:[%s579 + $0xf0] sm:$0xff]
    %v611 = vld [vmem:[%s579 + $0xf8] sm:$0xff]
    %v612 = vrot.slane %v131, 2
    %v613 = vrot.slane %v132, 2
    %616 = vmatprep.subr.mxu0 0.0
    %617 = vmatpush1.msra.mxu0 %v595
    %618 = vmatprep.subr.mxu0 0.0
    %619 = vmatpush1.msra.mxu0 %v594
    %620 = vmatprep.subr.mxu0 0.0
    %621 = vmatpush1.msra.mxu0 %v593
    %622 = vmatprep.subr.mxu0 0.0
    %623 = vmatpush1.msra.mxu0 %v592
    %624 = vmatprep.subr.mxu0 0.0
    %625 = vmatpush1.msra.mxu0 %v591
    %626 = vmatprep.subr.mxu0 0.0
    %627 = vmatpush1.msra.mxu0 %v590
    %628 = vmatprep.subr.mxu0 0.0
    %629 = vmatpush1.msra.mxu0 %v589
    %630 = vmatprep.subr.mxu0 0.0
    %631 = vmatpush1.msra.mxu0 %v588
    %632 = vmatprep.subr.mxu0 0.0
    %633 = vmatpush1.msra.mxu0 %v587
    %634 = vmatprep.subr.mxu0 0.0
    %635 = vmatpush1.msra.mxu0 %v586
    %636 = vmatprep.subr.mxu0 0.0
    %637 = vmatpush1.msra.mxu0 %v585
    %638 = vmatprep.subr.mxu0 0.0
    %639 = vmatpush1.msra.mxu0 %v584
    %640 = vmatprep.subr.mxu0 0.0
    %641 = vmatpush1.msra.mxu0 %v583
    %642 = vmatprep.subr.mxu0 0.0
    %643 = vmatpush1.msra.mxu0 %v582
    %644 = vmatprep.subr.mxu0 0.0
    %645 = vmatpush1.msra.mxu0 %v581
    %646 = vmatprep.subr.mxu0 0.0
    %647 = vmatpush1.msra.mxu0 %v580
    %648 = vmatprep.subr.mxu0 0.0
    %649 = vmatpush2.msra.mxu0 %v611
    %650 = vmatprep.subr.mxu0 0.0
    %651 = vmatpush2.msra.mxu0 %v610
    %652 = vmatprep.subr.mxu0 0.0
    %653 = vmatpush2.msra.mxu0 %v609
    %654 = vmatprep.subr.mxu0 0.0
    %655 = vmatpush2.msra.mxu0 %v608
    %656 = vmatprep.subr.mxu0 0.0
    %657 = vmatpush2.msra.mxu0 %v607
    %658 = vmatprep.subr.mxu0 0.0
    %659 = vmatpush2.msra.mxu0 %v606
    %660 = vmatprep.subr.mxu0 0.0
    %661 = vmatpush2.msra.mxu0 %v605
    %662 = vmatprep.subr.mxu0 0.0
    %663 = vmatpush2.msra.mxu0 %v604
    %664 = vmatprep.subr.mxu0 0.0
    %665 = vmatpush2.msra.mxu0 %v603
    %666 = vmatprep.subr.mxu0 0.0
    %667 = vmatpush2.msra.mxu0 %v602
    %668 = vmatprep.subr.mxu0 0.0
    %669 = vmatpush2.msra.mxu0 %v601
    %670 = vmatprep.subr.mxu0 0.0
    %671 = vmatpush2.msra.mxu0 %v600
    %672 = vmatprep.subr.mxu0 0.0
    %673 = vmatpush2.msra.mxu0 %v599
    %674 = vmatprep.subr.mxu0 0.0
    %675 = vmatpush2.msra.mxu0 %v598
    %676 = vmatprep.subr.mxu0 0.0
    %677 = vmatpush2.msra.mxu0 %v597
    %678 = vmatprep.subr.mxu0 0.0
    %679 = vmatpush2.msra.mxu0 %v596
    %680 = vmatprep.mubr.f32.mxu0 %v613
    %681 = vmatmul.mubr.f32.gmra.mxu0 %v612
    %v682 = vpop.f32.mrf.mxu0
    %v683 = vadd.f32 0.0, %v682
    %v684 = vpop.f32.mrf.mxu0
    %685 = vdwg.mxu0
    %v686 = vadd.f32 %v430, %v683
    %v687 = vrot.slane %v220, 2
    %v688 = vrot.slane %v221, 2
    %691 = vmatprep.subr.mxu0 0.0
    %692 = vmatpush1.msra.mxu0 %v595
    %693 = vmatprep.subr.mxu0 0.0
    %694 = vmatpush1.msra.mxu0 %v594
    %695 = vmatprep.subr.mxu0 0.0
    %696 = vmatpush1.msra.mxu0 %v593
    %697 = vmatprep.subr.mxu0 0.0
    %698 = vmatpush1.msra.mxu0 %v592
    %699 = vmatprep.subr.mxu0 0.0
    %700 = vmatpush1.msra.mxu0 %v591
    %701 = vmatprep.subr.mxu0 0.0
    %702 = vmatpush1.msra.mxu0 %v590
    %703 = vmatprep.subr.mxu0 0.0
    %704 = vmatpush1.msra.mxu0 %v589
    %705 = vmatprep.subr.mxu0 0.0
    %706 = vmatpush1.msra.mxu0 %v588
    %707 = vmatprep.subr.mxu0 0.0
    %708 = vmatpush1.msra.mxu0 %v587
    %709 = vmatprep.subr.mxu0 0.0
    %710 = vmatpush1.msra.mxu0 %v586
    %711 = vmatprep.subr.mxu0 0.0
    %712 = vmatpush1.msra.mxu0 %v585
    %713 = vmatprep.subr.mxu0 0.0
    %714 = vmatpush1.msra.mxu0 %v584
    %715 = vmatprep.subr.mxu0 0.0
    %716 = vmatpush1.msra.mxu0 %v583
    %717 = vmatprep.subr.mxu0 0.0
    %718 = vmatpush1.msra.mxu0 %v582
    %719 = vmatprep.subr.mxu0 0.0
    %720 = vmatpush1.msra.mxu0 %v581
    %721 = vmatprep.subr.mxu0 0.0
    %722 = vmatpush1.msra.mxu0 %v580
    %723 = vmatprep.subr.mxu0 0.0
    %724 = vmatpush2.msra.mxu0 %v611
    %725 = vmatprep.subr.mxu0 0.0
    %726 = vmatpush2.msra.mxu0 %v610
    %727 = vmatprep.subr.mxu0 0.0
    %728 = vmatpush2.msra.mxu0 %v609
    %729 = vmatprep.subr.mxu0 0.0
    %730 = vmatpush2.msra.mxu0 %v608
    %731 = vmatprep.subr.mxu0 0.0
    %732 = vmatpush2.msra.mxu0 %v607
    %733 = vmatprep.subr.mxu0 0.0
    %734 = vmatpush2.msra.mxu0 %v606
    %735 = vmatprep.subr.mxu0 0.0
    %736 = vmatpush2.msra.mxu0 %v605
    %737 = vmatprep.subr.mxu0 0.0
    %738 = vmatpush2.msra.mxu0 %v604
    %739 = vmatprep.subr.mxu0 0.0
    %740 = vmatpush2.msra.mxu0 %v603
    %741 = vmatprep.subr.mxu0 0.0
    %742 = vmatpush2.msra.mxu0 %v602
    %743 = vmatprep.subr.mxu0 0.0
    %744 = vmatpush2.msra.mxu0 %v601
    %745 = vmatprep.subr.mxu0 0.0
    %746 = vmatpush2.msra.mxu0 %v600
    %747 = vmatprep.subr.mxu0 0.0
    %748 = vmatpush2.msra.mxu0 %v599
    %749 = vmatprep.subr.mxu0 0.0
    %750 = vmatpush2.msra.mxu0 %v598
    %751 = vmatprep.subr.mxu0 0.0
    %752 = vmatpush2.msra.mxu0 %v597
    %753 = vmatprep.subr.mxu0 0.0
    %754 = vmatpush2.msra.mxu0 %v596
    %755 = vmatprep.mubr.f32.mxu0 %v688
    %756 = vmatmul.mubr.f32.gmra.mxu0 %v687
    %v757 = vpop.f32.mrf.mxu0
    %v758 = vadd.f32 0.0, %v757
    %v759 = vpop.f32.mrf.mxu0
    %760 = vdwg.mxu0
    %v761 = vadd.f32 %v576, %v758
    %s762 = scalar_lea.vmem %s4, 768
    %v763 = vld [vmem:[%s762] sm:$0xff]
    %v764 = vld [vmem:[%s762 + $0x8] sm:$0xff]
    %v765 = vld [vmem:[%s762 + $0x10] sm:$0xff]
    %v766 = vld [vmem:[%s762 + $0x18] sm:$0xff]
    %v767 = vld [vmem:[%s762 + $0x20] sm:$0xff]
    %v768 = vld [vmem:[%s762 + $0x28] sm:$0xff]
    %v769 = vld [vmem:[%s762 + $0x30] sm:$0xff]
    %v770 = vld [vmem:[%s762 + $0x38] sm:$0xff]
    %v771 = vld [vmem:[%s762 + $0x40] sm:$0xff]
    %v772 = vld [vmem:[%s762 + $0x48] sm:$0xff]
    %v773 = vld [vmem:[%s762 + $0x50] sm:$0xff]
    %v774 = vld [vmem:[%s762 + $0x58] sm:$0xff]
    %v775 = vld [vmem:[%s762 + $0x60] sm:$0xff]
    %v776 = vld [vmem:[%s762 + $0x68] sm:$0xff]
    %v777 = vld [vmem:[%s762 + $0x70] sm:$0xff]
    %v778 = vld [vmem:[%s762 + $0x78] sm:$0xff]
    %v779 = vld [vmem:[%s762 + $0x80] sm:$0xff]
    %v780 = vld [vmem:[%s762 + $0x88] sm:$0xff]
    %v781 = vld [vmem:[%s762 + $0x90] sm:$0xff]
    %v782 = vld [vmem:[%s762 + $0x98] sm:$0xff]
    %v783 = vld [vmem:[%s762 + $0xa0] sm:$0xff]
    %v784 = vld [vmem:[%s762 + $0xa8] sm:$0xff]
    %v785 = vld [vmem:[%s762 + $0xb0] sm:$0xff]
    %v786 = vld [vmem:[%s762 + $0xb8] sm:$0xff]
    %v787 = vld [vmem:[%s762 + $0xc0] sm:$0xff]
    %v788 = vld [vmem:[%s762 + $0xc8] sm:$0xff]
    %v789 = vld [vmem:[%s762 + $0xd0] sm:$0xff]
    %v790 = vld [vmem:[%s762 + $0xd8] sm:$0xff]
    %v791 = vld [vmem:[%s762 + $0xe0] sm:$0xff]
    %v792 = vld [vmem:[%s762 + $0xe8] sm:$0xff]
    %v793 = vld [vmem:[%s762 + $0xf0] sm:$0xff]
    %v794 = vld [vmem:[%s762 + $0xf8] sm:$0xff]
    %v795 = vrot.slane %v131, 3
    %v796 = vrot.slane %v132, 3
    %799 = vmatprep.subr.mxu0 0.0
    %800 = vmatpush1.msra.mxu0 %v778
    %801 = vmatprep.subr.mxu0 0.0
    %802 = vmatpush1.msra.mxu0 %v777
    %803 = vmatprep.subr.mxu0 0.0
    %804 = vmatpush1.msra.mxu0 %v776
    %805 = vmatprep.subr.mxu0 0.0
    %806 = vmatpush1.msra.mxu0 %v775
    %807 = vmatprep.subr.mxu0 0.0
    %808 = vmatpush1.msra.mxu0 %v774
    %809 = vmatprep.subr.mxu0 0.0
    %810 = vmatpush1.msra.mxu0 %v773
    %811 = vmatprep.subr.mxu0 0.0
    %812 = vmatpush1.msra.mxu0 %v772
    %813 = vmatprep.subr.mxu0 0.0
    %814 = vmatpush1.msra.mxu0 %v771
    %815 = vmatprep.subr.mxu0 0.0
    %816 = vmatpush1.msra.mxu0 %v770
    %817 = vmatprep.subr.mxu0 0.0
    %818 = vmatpush1.msra.mxu0 %v769
    %819 = vmatprep.subr.mxu0 0.0
    %820 = vmatpush1.msra.mxu0 %v768
    %821 = vmatprep.subr.mxu0 0.0
    %822 = vmatpush1.msra.mxu0 %v767
    %823 = vmatprep.subr.mxu0 0.0
    %824 = vmatpush1.msra.mxu0 %v766
    %825 = vmatprep.subr.mxu0 0.0
    %826 = vmatpush1.msra.mxu0 %v765
    %827 = vmatprep.subr.mxu0 0.0
    %828 = vmatpush1.msra.mxu0 %v764
    %829 = vmatprep.subr.mxu0 0.0
    %830 = vmatpush1.msra.mxu0 %v763
    %831 = vmatprep.subr.mxu0 0.0
    %832 = vmatpush2.msra.mxu0 %v794
    %833 = vmatprep.subr.mxu0 0.0
    %834 = vmatpush2.msra.mxu0 %v793
    %835 = vmatprep.subr.mxu0 0.0
    %836 = vmatpush2.msra.mxu0 %v792
    %837 = vmatprep.subr.mxu0 0.0
    %838 = vmatpush2.msra.mxu0 %v791
    %839 = vmatprep.subr.mxu0 0.0
    %840 = vmatpush2.msra.mxu0 %v790
    %841 = vmatprep.subr.mxu0 0.0
    %842 = vmatpush2.msra.mxu0 %v789
    %843 = vmatprep.subr.mxu0 0.0
    %844 = vmatpush2.msra.mxu0 %v788
    %845 = vmatprep.subr.mxu0 0.0
    %846 = vmatpush2.msra.mxu0 %v787
    %847 = vmatprep.subr.mxu0 0.0
    %848 = vmatpush2.msra.mxu0 %v786
    %849 = vmatprep.subr.mxu0 0.0
    %850 = vmatpush2.msra.mxu0 %v785
    %851 = vmatprep.subr.mxu0 0.0
    %852 = vmatpush2.msra.mxu0 %v784
    %853 = vmatprep.subr.mxu0 0.0
    %854 = vmatpush2.msra.mxu0 %v783
    %855 = vmatprep.subr.mxu0 0.0
    %856 = vmatpush2.msra.mxu0 %v782
    %857 = vmatprep.subr.mxu0 0.0
    %858 = vmatpush2.msra.mxu0 %v781
    %859 = vmatprep.subr.mxu0 0.0
    %860 = vmatpush2.msra.mxu0 %v780
    %861 = vmatprep.subr.mxu0 0.0
    %862 = vmatpush2.msra.mxu0 %v779
    %863 = vmatprep.mubr.f32.mxu0 %v796
    %864 = vmatmul.mubr.f32.gmra.mxu0 %v795
    %v865 = vpop.f32.mrf.mxu0
    %v866 = vadd.f32 0.0, %v865
    %v867 = vpop.f32.mrf.mxu0
    %868 = vdwg.mxu0
    %v869 = vadd.f32 %v686, %v866
    %v870 = vrot.slane %v220, 3
    %v871 = vrot.slane %v221, 3
    %874 = vmatprep.subr.mxu0 0.0
    %875 = vmatpush1.msra.mxu0 %v778
    %876 = vmatprep.subr.mxu0 0.0
    %877 = vmatpush1.msra.mxu0 %v777
    %878 = vmatprep.subr.mxu0 0.0
    %879 = vmatpush1.msra.mxu0 %v776
    %880 = vmatprep.subr.mxu0 0.0
    %881 = vmatpush1.msra.mxu0 %v775
    %882 = vmatprep.subr.mxu0 0.0
    %883 = vmatpush1.msra.mxu0 %v774
    %884 = vmatprep.subr.mxu0 0.0
    %885 = vmatpush1.msra.mxu0 %v773
    %886 = vmatprep.subr.mxu0 0.0
    %887 = vmatpush1.msra.mxu0 %v772
    %888 = vmatprep.subr.mxu0 0.0
    %889 = vmatpush1.msra.mxu0 %v771
    %890 = vmatprep.subr.mxu0 0.0
    %891 = vmatpush1.msra.mxu0 %v770
    %892 = vmatprep.subr.mxu0 0.0
    %893 = vmatpush1.msra.mxu0 %v769
    %894 = vmatprep.subr.mxu0 0.0
    %895 = vmatpush1.msra.mxu0 %v768
    %896 = vmatprep.subr.mxu0 0.0
    %897 = vmatpush1.msra.mxu0 %v767
    %898 = vmatprep.subr.mxu0 0.0
    %899 = vmatpush1.msra.mxu0 %v766
    %900 = vmatprep.subr.mxu0 0.0
    %901 = vmatpush1.msra.mxu0 %v765
    %902 = vmatprep.subr.mxu0 0.0
    %903 = vmatpush1.msra.mxu0 %v764
    %904 = vmatprep.subr.mxu0 0.0
    %905 = vmatpush1.msra.mxu0 %v763
    %906 = vmatprep.subr.mxu0 0.0
    %907 = vmatpush2.msra.mxu0 %v794
    %908 = vmatprep.subr.mxu0 0.0
    %909 = vmatpush2.msra.mxu0 %v793
    %910 = vmatprep.subr.mxu0 0.0
    %911 = vmatpush2.msra.mxu0 %v792
    %912 = vmatprep.subr.mxu0 0.0
    %913 = vmatpush2.msra.mxu0 %v791
    %914 = vmatprep.subr.mxu0 0.0
    %915 = vmatpush2.msra.mxu0 %v790
    %916 = vmatprep.subr.mxu0 0.0
    %917 = vmatpush2.msra.mxu0 %v789
    %918 = vmatprep.subr.mxu0 0.0
    %919 = vmatpush2.msra.mxu0 %v788
    %920 = vmatprep.subr.mxu0 0.0
    %921 = vmatpush2.msra.mxu0 %v787
    %922 = vmatprep.subr.mxu0 0.0
    %923 = vmatpush2.msra.mxu0 %v786
    %924 = vmatprep.subr.mxu0 0.0
    %925 = vmatpush2.msra.mxu0 %v785
    %926 = vmatprep.subr.mxu0 0.0
    %927 = vmatpush2.msra.mxu0 %v784
    %928 = vmatprep.subr.mxu0 0.0
    %929 = vmatpush2.msra.mxu0 %v783
    %930 = vmatprep.subr.mxu0 0.0
    %931 = vmatpush2.msra.mxu0 %v782
    %932 = vmatprep.subr.mxu0 0.0
    %933 = vmatpush2.msra.mxu0 %v781
    %934 = vmatprep.subr.mxu0 0.0
    %935 = vmatpush2.msra.mxu0 %v780
    %936 = vmatprep.subr.mxu0 0.0
    %937 = vmatpush2.msra.mxu0 %v779
    %938 = vmatprep.mubr.f32.mxu0 %v871
    %939 = vmatmul.mubr.f32.gmra.mxu0 %v870
    %v940 = vpop.f32.mrf.mxu0
    %v941 = vadd.f32 0.0, %v940
    %v942 = vpop.f32.mrf.mxu0
    %943 = vdwg.mxu0
    %v944 = vadd.f32 %v761, %v941
    %s945 = scalar_lea.vmem %s4, 1024
    %v946 = vld [vmem:[%s945] sm:$0xff]
    %v947 = vld [vmem:[%s945 + $0x8] sm:$0xff]
    %v948 = vld [vmem:[%s945 + $0x10] sm:$0xff]
    %v949 = vld [vmem:[%s945 + $0x18] sm:$0xff]
    %v950 = vld [vmem:[%s945 + $0x20] sm:$0xff]
    %v951 = vld [vmem:[%s945 + $0x28] sm:$0xff]
    %v952 = vld [vmem:[%s945 + $0x30] sm:$0xff]
    %v953 = vld [vmem:[%s945 + $0x38] sm:$0xff]
    %v954 = vld [vmem:[%s945 + $0x40] sm:$0xff]
    %v955 = vld [vmem:[%s945 + $0x48] sm:$0xff]
    %v956 = vld [vmem:[%s945 + $0x50] sm:$0xff]
    %v957 = vld [vmem:[%s945 + $0x58] sm:$0xff]
    %v958 = vld [vmem:[%s945 + $0x60] sm:$0xff]
    %v959 = vld [vmem:[%s945 + $0x68] sm:$0xff]
    %v960 = vld [vmem:[%s945 + $0x70] sm:$0xff]
    %v961 = vld [vmem:[%s945 + $0x78] sm:$0xff]
    %v962 = vld [vmem:[%s945 + $0x80] sm:$0xff]
    %v963 = vld [vmem:[%s945 + $0x88] sm:$0xff]
    %v964 = vld [vmem:[%s945 + $0x90] sm:$0xff]
    %v965 = vld [vmem:[%s945 + $0x98] sm:$0xff]
    %v966 = vld [vmem:[%s945 + $0xa0] sm:$0xff]
    %v967 = vld [vmem:[%s945 + $0xa8] sm:$0xff]
    %v968 = vld [vmem:[%s945 + $0xb0] sm:$0xff]
    %v969 = vld [vmem:[%s945 + $0xb8] sm:$0xff]
    %v970 = vld [vmem:[%s945 + $0xc0] sm:$0xff]
    %v971 = vld [vmem:[%s945 + $0xc8] sm:$0xff]
    %v972 = vld [vmem:[%s945 + $0xd0] sm:$0xff]
    %v973 = vld [vmem:[%s945 + $0xd8] sm:$0xff]
    %v974 = vld [vmem:[%s945 + $0xe0] sm:$0xff]
    %v975 = vld [vmem:[%s945 + $0xe8] sm:$0xff]
    %v976 = vld [vmem:[%s945 + $0xf0] sm:$0xff]
    %v977 = vld [vmem:[%s945 + $0xf8] sm:$0xff]
    %v978 = vrot.slane %v131, 4
    %v979 = vrot.slane %v132, 4
    %982 = vmatprep.subr.mxu0 0.0
    %983 = vmatpush1.msra.mxu0 %v961
    %984 = vmatprep.subr.mxu0 0.0
    %985 = vmatpush1.msra.mxu0 %v960
    %986 = vmatprep.subr.mxu0 0.0
    %987 = vmatpush1.msra.mxu0 %v959
    %988 = vmatprep.subr.mxu0 0.0
    %989 = vmatpush1.msra.mxu0 %v958
    %990 = vmatprep.subr.mxu0 0.0
    %991 = vmatpush1.msra.mxu0 %v957
    %992 = vmatprep.subr.mxu0 0.0
    %993 = vmatpush1.msra.mxu0 %v956
    %994 = vmatprep.subr.mxu0 0.0
    %995 = vmatpush1.msra.mxu0 %v955
    %996 = vmatprep.subr.mxu0 0.0
    %997 = vmatpush1.msra.mxu0 %v954
    %998 = vmatprep.subr.mxu0 0.0
    %999 = vmatpush1.msra.mxu0 %v953
    %1000 = vmatprep.subr.mxu0 0.0
    %1001 = vmatpush1.msra.mxu0 %v952
    %1002 = vmatprep.subr.mxu0 0.0
    %1003 = vmatpush1.msra.mxu0 %v951
    %1004 = vmatprep.subr.mxu0 0.0
    %1005 = vmatpush1.msra.mxu0 %v950
    %1006 = vmatprep.subr.mxu0 0.0
    %1007 = vmatpush1.msra.mxu0 %v949
    %1008 = vmatprep.subr.mxu0 0.0
    %1009 = vmatpush1.msra.mxu0 %v948
    %1010 = vmatprep.subr.mxu0 0.0
    %1011 = vmatpush1.msra.mxu0 %v947
    %1012 = vmatprep.subr.mxu0 0.0
    %1013 = vmatpush1.msra.mxu0 %v946
    %1014 = vmatprep.subr.mxu0 0.0
    %1015 = vmatpush2.msra.mxu0 %v977
    %1016 = vmatprep.subr.mxu0 0.0
    %1017 = vmatpush2.msra.mxu0 %v976
    %1018 = vmatprep.subr.mxu0 0.0
    %1019 = vmatpush2.msra.mxu0 %v975
    %1020 = vmatprep.subr.mxu0 0.0
    %1021 = vmatpush2.msra.mxu0 %v974
    %1022 = vmatprep.subr.mxu0 0.0
    %1023 = vmatpush2.msra.mxu0 %v973
    %1024 = vmatprep.subr.mxu0 0.0
    %1025 = vmatpush2.msra.mxu0 %v972
    %1026 = vmatprep.subr.mxu0 0.0
    %1027 = vmatpush2.msra.mxu0 %v971
    %1028 = vmatprep.subr.mxu0 0.0
    %1029 = vmatpush2.msra.mxu0 %v970
    %1030 = vmatprep.subr.mxu0 0.0
    %1031 = vmatpush2.msra.mxu0 %v969
    %1032 = vmatprep.subr.mxu0 0.0
    %1033 = vmatpush2.msra.mxu0 %v968
    %1034 = vmatprep.subr.mxu0 0.0
    %1035 = vmatpush2.msra.mxu0 %v967
    %1036 = vmatprep.subr.mxu0 0.0
    %1037 = vmatpush2.msra.mxu0 %v966
    %1038 = vmatprep.subr.mxu0 0.0
    %1039 = vmatpush2.msra.mxu0 %v965
    %1040 = vmatprep.subr.mxu0 0.0
    %1041 = vmatpush2.msra.mxu0 %v964
    %1042 = vmatprep.subr.mxu0 0.0
    %1043 = vmatpush2.msra.mxu0 %v963
    %1044 = vmatprep.subr.mxu0 0.0
    %1045 = vmatpush2.msra.mxu0 %v962
    %1046 = vmatprep.mubr.f32.mxu0 %v979
    %1047 = vmatmul.mubr.f32.gmra.mxu0 %v978
    %v1048 = vpop.f32.mrf.mxu0
    %v1049 = vadd.f32 0.0, %v1048
    %v1050 = vpop.f32.mrf.mxu0
    %1051 = vdwg.mxu0
    %v1052 = vadd.f32 %v869, %v1049
    %v1053 = vrot.slane %v220, 4
    %v1054 = vrot.slane %v221, 4
    %1057 = vmatprep.subr.mxu0 0.0
    %1058 = vmatpush1.msra.mxu0 %v961
    %1059 = vmatprep.subr.mxu0 0.0
    %1060 = vmatpush1.msra.mxu0 %v960
    %1061 = vmatprep.subr.mxu0 0.0
    %1062 = vmatpush1.msra.mxu0 %v959
    %1063 = vmatprep.subr.mxu0 0.0
    %1064 = vmatpush1.msra.mxu0 %v958
    %1065 = vmatprep.subr.mxu0 0.0
    %1066 = vmatpush1.msra.mxu0 %v957
    %1067 = vmatprep.subr.mxu0 0.0
    %1068 = vmatpush1.msra.mxu0 %v956
    %1069 = vmatprep.subr.mxu0 0.0
    %1070 = vmatpush1.msra.mxu0 %v955
    %1071 = vmatprep.subr.mxu0 0.0
    %1072 = vmatpush1.msra.mxu0 %v954
    %1073 = vmatprep.subr.mxu0 0.0
    %1074 = vmatpush1.msra.mxu0 %v953
    %1075 = vmatprep.subr.mxu0 0.0
    %1076 = vmatpush1.msra.mxu0 %v952
    %1077 = vmatprep.subr.mxu0 0.0
    %1078 = vmatpush1.msra.mxu0 %v951
    %1079 = vmatprep.subr.mxu0 0.0
    %1080 = vmatpush1.msra.mxu0 %v950
    %1081 = vmatprep.subr.mxu0 0.0
    %1082 = vmatpush1.msra.mxu0 %v949
    %1083 = vmatprep.subr.mxu0 0.0
    %1084 = vmatpush1.msra.mxu0 %v948
    %1085 = vmatprep.subr.mxu0 0.0
    %1086 = vmatpush1.msra.mxu0 %v947
    %1087 = vmatprep.subr.mxu0 0.0
    %1088 = vmatpush1.msra.mxu0 %v946
    %1089 = vmatprep.subr.mxu0 0.0
    %1090 = vmatpush2.msra.mxu0 %v977
    %1091 = vmatprep.subr.mxu0 0.0
    %1092 = vmatpush2.msra.mxu0 %v976
    %1093 = vmatprep.subr.mxu0 0.0
    %1094 = vmatpush2.msra.mxu0 %v975
    %1095 = vmatprep.subr.mxu0 0.0
    %1096 = vmatpush2.msra.mxu0 %v974
    %1097 = vmatprep.subr.mxu0 0.0
    %1098 = vmatpush2.msra.mxu0 %v973
    %1099 = vmatprep.subr.mxu0 0.0
    %1100 = vmatpush2.msra.mxu0 %v972
    %1101 = vmatprep.subr.mxu0 0.0
    %1102 = vmatpush2.msra.mxu0 %v971
    %1103 = vmatprep.subr.mxu0 0.0
    %1104 = vmatpush2.msra.mxu0 %v970
    %1105 = vmatprep.subr.mxu0 0.0
    %1106 = vmatpush2.msra.mxu0 %v969
    %1107 = vmatprep.subr.mxu0 0.0
    %1108 = vmatpush2.msra.mxu0 %v968
    %1109 = vmatprep.subr.mxu0 0.0
    %1110 = vmatpush2.msra.mxu0 %v967
    %1111 = vmatprep.subr.mxu0 0.0
    %1112 = vmatpush2.msra.mxu0 %v966
    %1113 = vmatprep.subr.mxu0 0.0
    %1114 = vmatpush2.msra.mxu0 %v965
    %1115 = vmatprep.subr.mxu0 0.0
    %1116 = vmatpush2.msra.mxu0 %v964
    %1117 = vmatprep.subr.mxu0 0.0
    %1118 = vmatpush2.msra.mxu0 %v963
    %1119 = vmatprep.subr.mxu0 0.0
    %1120 = vmatpush2.msra.mxu0 %v962
    %1121 = vmatprep.mubr.f32.mxu0 %v1054
    %1122 = vmatmul.mubr.f32.gmra.mxu0 %v1053
    %v1123 = vpop.f32.mrf.mxu0
    %v1124 = vadd.f32 0.0, %v1123
    %v1125 = vpop.f32.mrf.mxu0
    %1126 = vdwg.mxu0
    %v1127 = vadd.f32 %v944, %v1124
    %s1128 = scalar_lea.vmem %s4, 1280
    %v1129 = vld [vmem:[%s1128] sm:$0xff]
    %v1130 = vld [vmem:[%s1128 + $0x8] sm:$0xff]
    %v1131 = vld [vmem:[%s1128 + $0x10] sm:$0xff]
    %v1132 = vld [vmem:[%s1128 + $0x18] sm:$0xff]
    %v1133 = vld [vmem:[%s1128 + $0x20] sm:$0xff]
    %v1134 = vld [vmem:[%s1128 + $0x28] sm:$0xff]
    %v1135 = vld [vmem:[%s1128 + $0x30] sm:$0xff]
    %v1136 = vld [vmem:[%s1128 + $0x38] sm:$0xff]
    %v1137 = vld [vmem:[%s1128 + $0x40] sm:$0xff]
    %v1138 = vld [vmem:[%s1128 + $0x48] sm:$0xff]
    %v1139 = vld [vmem:[%s1128 + $0x50] sm:$0xff]
    %v1140 = vld [vmem:[%s1128 + $0x58] sm:$0xff]
    %v1141 = vld [vmem:[%s1128 + $0x60] sm:$0xff]
    %v1142 = vld [vmem:[%s1128 + $0x68] sm:$0xff]
    %v1143 = vld [vmem:[%s1128 + $0x70] sm:$0xff]
    %v1144 = vld [vmem:[%s1128 + $0x78] sm:$0xff]
    %v1145 = vld [vmem:[%s1128 + $0x80] sm:$0xff]
    %v1146 = vld [vmem:[%s1128 + $0x88] sm:$0xff]
    %v1147 = vld [vmem:[%s1128 + $0x90] sm:$0xff]
    %v1148 = vld [vmem:[%s1128 + $0x98] sm:$0xff]
    %v1149 = vld [vmem:[%s1128 + $0xa0] sm:$0xff]
    %v1150 = vld [vmem:[%s1128 + $0xa8] sm:$0xff]
    %v1151 = vld [vmem:[%s1128 + $0xb0] sm:$0xff]
    %v1152 = vld [vmem:[%s1128 + $0xb8] sm:$0xff]
    %v1153 = vld [vmem:[%s1128 + $0xc0] sm:$0xff]
    %v1154 = vld [vmem:[%s1128 + $0xc8] sm:$0xff]
    %v1155 = vld [vmem:[%s1128 + $0xd0] sm:$0xff]
    %v1156 = vld [vmem:[%s1128 + $0xd8] sm:$0xff]
    %v1157 = vld [vmem:[%s1128 + $0xe0] sm:$0xff]
    %v1158 = vld [vmem:[%s1128 + $0xe8] sm:$0xff]
    %v1159 = vld [vmem:[%s1128 + $0xf0] sm:$0xff]
    %v1160 = vld [vmem:[%s1128 + $0xf8] sm:$0xff]
    %v1161 = vrot.slane %v131, 5
    %v1162 = vrot.slane %v132, 5
    %1165 = vmatprep.subr.mxu0 0.0
    %1166 = vmatpush1.msra.mxu0 %v1144
    %1167 = vmatprep.subr.mxu0 0.0
    %1168 = vmatpush1.msra.mxu0 %v1143
    %1169 = vmatprep.subr.mxu0 0.0
    %1170 = vmatpush1.msra.mxu0 %v1142
    %1171 = vmatprep.subr.mxu0 0.0
    %1172 = vmatpush1.msra.mxu0 %v1141
    %1173 = vmatprep.subr.mxu0 0.0
    %1174 = vmatpush1.msra.mxu0 %v1140
    %1175 = vmatprep.subr.mxu0 0.0
    %1176 = vmatpush1.msra.mxu0 %v1139
    %1177 = vmatprep.subr.mxu0 0.0
    %1178 = vmatpush1.msra.mxu0 %v1138
    %1179 = vmatprep.subr.mxu0 0.0
    %1180 = vmatpush1.msra.mxu0 %v1137
    %1181 = vmatprep.subr.mxu0 0.0
    %1182 = vmatpush1.msra.mxu0 %v1136
    %1183 = vmatprep.subr.mxu0 0.0
    %1184 = vmatpush1.msra.mxu0 %v1135
    %1185 = vmatprep.subr.mxu0 0.0
    %1186 = vmatpush1.msra.mxu0 %v1134
    %1187 = vmatprep.subr.mxu0 0.0
    %1188 = vmatpush1.msra.mxu0 %v1133
    %1189 = vmatprep.subr.mxu0 0.0
    %1190 = vmatpush1.msra.mxu0 %v1132
    %1191 = vmatprep.subr.mxu0 0.0
    %1192 = vmatpush1.msra.mxu0 %v1131
    %1193 = vmatprep.subr.mxu0 0.0
    %1194 = vmatpush1.msra.mxu0 %v1130
    %1195 = vmatprep.subr.mxu0 0.0
    %1196 = vmatpush1.msra.mxu0 %v1129
    %1197 = vmatprep.subr.mxu0 0.0
    %1198 = vmatpush2.msra.mxu0 %v1160
    %1199 = vmatprep.subr.mxu0 0.0
    %1200 = vmatpush2.msra.mxu0 %v1159
    %1201 = vmatprep.subr.mxu0 0.0
    %1202 = vmatpush2.msra.mxu0 %v1158
    %1203 = vmatprep.subr.mxu0 0.0
    %1204 = vmatpush2.msra.mxu0 %v1157
    %1205 = vmatprep.subr.mxu0 0.0
    %1206 = vmatpush2.msra.mxu0 %v1156
    %1207 = vmatprep.subr.mxu0 0.0
    %1208 = vmatpush2.msra.mxu0 %v1155
    %1209 = vmatprep.subr.mxu0 0.0
    %1210 = vmatpush2.msra.mxu0 %v1154
    %1211 = vmatprep.subr.mxu0 0.0
    %1212 = vmatpush2.msra.mxu0 %v1153
    %1213 = vmatprep.subr.mxu0 0.0
    %1214 = vmatpush2.msra.mxu0 %v1152
    %1215 = vmatprep.subr.mxu0 0.0
    %1216 = vmatpush2.msra.mxu0 %v1151
    %1217 = vmatprep.subr.mxu0 0.0
    %1218 = vmatpush2.msra.mxu0 %v1150
    %1219 = vmatprep.subr.mxu0 0.0
    %1220 = vmatpush2.msra.mxu0 %v1149
    %1221 = vmatprep.subr.mxu0 0.0
    %1222 = vmatpush2.msra.mxu0 %v1148
    %1223 = vmatprep.subr.mxu0 0.0
    %1224 = vmatpush2.msra.mxu0 %v1147
    %1225 = vmatprep.subr.mxu0 0.0
    %1226 = vmatpush2.msra.mxu0 %v1146
    %1227 = vmatprep.subr.mxu0 0.0
    %1228 = vmatpush2.msra.mxu0 %v1145
    %1229 = vmatprep.mubr.f32.mxu0 %v1162
    %1230 = vmatmul.mubr.f32.gmra.mxu0 %v1161
    %v1231 = vpop.f32.mrf.mxu0
    %v1232 = vadd.f32 0.0, %v1231
    %v1233 = vpop.f32.mrf.mxu0
    %1234 = vdwg.mxu0
    %v1235 = vadd.f32 %v1052, %v1232
    %v1236 = vrot.slane %v220, 5
    %v1237 = vrot.slane %v221, 5
    %1240 = vmatprep.subr.mxu0 0.0
    %1241 = vmatpush1.msra.mxu0 %v1144
    %1242 = vmatprep.subr.mxu0 0.0
    %1243 = vmatpush1.msra.mxu0 %v1143
    %1244 = vmatprep.subr.mxu0 0.0
    %1245 = vmatpush1.msra.mxu0 %v1142
    %1246 = vmatprep.subr.mxu0 0.0
    %1247 = vmatpush1.msra.mxu0 %v1141
    %1248 = vmatprep.subr.mxu0 0.0
    %1249 = vmatpush1.msra.mxu0 %v1140
    %1250 = vmatprep.subr.mxu0 0.0
    %1251 = vmatpush1.msra.mxu0 %v1139
    %1252 = vmatprep.subr.mxu0 0.0
    %1253 = vmatpush1.msra.mxu0 %v1138
    %1254 = vmatprep.subr.mxu0 0.0
    %1255 = vmatpush1.msra.mxu0 %v1137
    %1256 = vmatprep.subr.mxu0 0.0
    %1257 = vmatpush1.msra.mxu0 %v1136
    %1258 = vmatprep.subr.mxu0 0.0
    %1259 = vmatpush1.msra.mxu0 %v1135
    %1260 = vmatprep.subr.mxu0 0.0
    %1261 = vmatpush1.msra.mxu0 %v1134
    %1262 = vmatprep.subr.mxu0 0.0
    %1263 = vmatpush1.msra.mxu0 %v1133
    %1264 = vmatprep.subr.mxu0 0.0
    %1265 = vmatpush1.msra.mxu0 %v1132
    %1266 = vmatprep.subr.mxu0 0.0
    %1267 = vmatpush1.msra.mxu0 %v1131
    %1268 = vmatprep.subr.mxu0 0.0
    %1269 = vmatpush1.msra.mxu0 %v1130
    %1270 = vmatprep.subr.mxu0 0.0
    %1271 = vmatpush1.msra.mxu0 %v1129
    %1272 = vmatprep.subr.mxu0 0.0
    %1273 = vmatpush2.msra.mxu0 %v1160
    %1274 = vmatprep.subr.mxu0 0.0
    %1275 = vmatpush2.msra.mxu0 %v1159
    %1276 = vmatprep.subr.mxu0 0.0
    %1277 = vmatpush2.msra.mxu0 %v1158
    %1278 = vmatprep.subr.mxu0 0.0
    %1279 = vmatpush2.msra.mxu0 %v1157
    %1280 = vmatprep.subr.mxu0 0.0
    %1281 = vmatpush2.msra.mxu0 %v1156
    %1282 = vmatprep.subr.mxu0 0.0
    %1283 = vmatpush2.msra.mxu0 %v1155
    %1284 = vmatprep.subr.mxu0 0.0
    %1285 = vmatpush2.msra.mxu0 %v1154
    %1286 = vmatprep.subr.mxu0 0.0
    %1287 = vmatpush2.msra.mxu0 %v1153
    %1288 = vmatprep.subr.mxu0 0.0
    %1289 = vmatpush2.msra.mxu0 %v1152
    %1290 = vmatprep.subr.mxu0 0.0
    %1291 = vmatpush2.msra.mxu0 %v1151
    %1292 = vmatprep.subr.mxu0 0.0
    %1293 = vmatpush2.msra.mxu0 %v1150
    %1294 = vmatprep.subr.mxu0 0.0
    %1295 = vmatpush2.msra.mxu0 %v1149
    %1296 = vmatprep.subr.mxu0 0.0
    %1297 = vmatpush2.msra.mxu0 %v1148
    %1298 = vmatprep.subr.mxu0 0.0
    %1299 = vmatpush2.msra.mxu0 %v1147
    %1300 = vmatprep.subr.mxu0 0.0
    %1301 = vmatpush2.msra.mxu0 %v1146
    %1302 = vmatprep.subr.mxu0 0.0
    %1303 = vmatpush2.msra.mxu0 %v1145
    %1304 = vmatprep.mubr.f32.mxu0 %v1237
    %1305 = vmatmul.mubr.f32.gmra.mxu0 %v1236
    %v1306 = vpop.f32.mrf.mxu0
    %v1307 = vadd.f32 0.0, %v1306
    %v1308 = vpop.f32.mrf.mxu0
    %1309 = vdwg.mxu0
    %v1310 = vadd.f32 %v1127, %v1307
    %s1311 = scalar_lea.vmem %s4, 1536
    %v1312 = vld [vmem:[%s1311] sm:$0xff]
    %v1313 = vld [vmem:[%s1311 + $0x8] sm:$0xff]
    %v1314 = vld [vmem:[%s1311 + $0x10] sm:$0xff]
    %v1315 = vld [vmem:[%s1311 + $0x18] sm:$0xff]
    %v1316 = vld [vmem:[%s1311 + $0x20] sm:$0xff]
    %v1317 = vld [vmem:[%s1311 + $0x28] sm:$0xff]
    %v1318 = vld [vmem:[%s1311 + $0x30] sm:$0xff]
    %v1319 = vld [vmem:[%s1311 + $0x38] sm:$0xff]
    %v1320 = vld [vmem:[%s1311 + $0x40] sm:$0xff]
    %v1321 = vld [vmem:[%s1311 + $0x48] sm:$0xff]
    %v1322 = vld [vmem:[%s1311 + $0x50] sm:$0xff]
    %v1323 = vld [vmem:[%s1311 + $0x58] sm:$0xff]
    %v1324 = vld [vmem:[%s1311 + $0x60] sm:$0xff]
    %v1325 = vld [vmem:[%s1311 + $0x68] sm:$0xff]
    %v1326 = vld [vmem:[%s1311 + $0x70] sm:$0xff]
    %v1327 = vld [vmem:[%s1311 + $0x78] sm:$0xff]
    %v1328 = vld [vmem:[%s1311 + $0x80] sm:$0xff]
    %v1329 = vld [vmem:[%s1311 + $0x88] sm:$0xff]
    %v1330 = vld [vmem:[%s1311 + $0x90] sm:$0xff]
    %v1331 = vld [vmem:[%s1311 + $0x98] sm:$0xff]
    %v1332 = vld [vmem:[%s1311 + $0xa0] sm:$0xff]
    %v1333 = vld [vmem:[%s1311 + $0xa8] sm:$0xff]
    %v1334 = vld [vmem:[%s1311 + $0xb0] sm:$0xff]
    %v1335 = vld [vmem:[%s1311 + $0xb8] sm:$0xff]
    %v1336 = vld [vmem:[%s1311 + $0xc0] sm:$0xff]
    %v1337 = vld [vmem:[%s1311 + $0xc8] sm:$0xff]
    %v1338 = vld [vmem:[%s1311 + $0xd0] sm:$0xff]
    %v1339 = vld [vmem:[%s1311 + $0xd8] sm:$0xff]
    %v1340 = vld [vmem:[%s1311 + $0xe0] sm:$0xff]
    %v1341 = vld [vmem:[%s1311 + $0xe8] sm:$0xff]
    %v1342 = vld [vmem:[%s1311 + $0xf0] sm:$0xff]
    %v1343 = vld [vmem:[%s1311 + $0xf8] sm:$0xff]
    %v1344 = vrot.slane %v131, 6
    %v1345 = vrot.slane %v132, 6
    %1348 = vmatprep.subr.mxu0 0.0
    %1349 = vmatpush1.msra.mxu0 %v1327
    %1350 = vmatprep.subr.mxu0 0.0
    %1351 = vmatpush1.msra.mxu0 %v1326
    %1352 = vmatprep.subr.mxu0 0.0
    %1353 = vmatpush1.msra.mxu0 %v1325
    %1354 = vmatprep.subr.mxu0 0.0
    %1355 = vmatpush1.msra.mxu0 %v1324
    %1356 = vmatprep.subr.mxu0 0.0
    %1357 = vmatpush1.msra.mxu0 %v1323
    %1358 = vmatprep.subr.mxu0 0.0
    %1359 = vmatpush1.msra.mxu0 %v1322
    %1360 = vmatprep.subr.mxu0 0.0
    %1361 = vmatpush1.msra.mxu0 %v1321
    %1362 = vmatprep.subr.mxu0 0.0
    %1363 = vmatpush1.msra.mxu0 %v1320
    %1364 = vmatprep.subr.mxu0 0.0
    %1365 = vmatpush1.msra.mxu0 %v1319
    %1366 = vmatprep.subr.mxu0 0.0
    %1367 = vmatpush1.msra.mxu0 %v1318
    %1368 = vmatprep.subr.mxu0 0.0
    %1369 = vmatpush1.msra.mxu0 %v1317
    %1370 = vmatprep.subr.mxu0 0.0
    %1371 = vmatpush1.msra.mxu0 %v1316
    %1372 = vmatprep.subr.mxu0 0.0
    %1373 = vmatpush1.msra.mxu0 %v1315
    %1374 = vmatprep.subr.mxu0 0.0
    %1375 = vmatpush1.msra.mxu0 %v1314
    %1376 = vmatprep.subr.mxu0 0.0
    %1377 = vmatpush1.msra.mxu0 %v1313
    %1378 = vmatprep.subr.mxu0 0.0
    %1379 = vmatpush1.msra.mxu0 %v1312
    %1380 = vmatprep.subr.mxu0 0.0
    %1381 = vmatpush2.msra.mxu0 %v1343
    %1382 = vmatprep.subr.mxu0 0.0
    %1383 = vmatpush2.msra.mxu0 %v1342
    %1384 = vmatprep.subr.mxu0 0.0
    %1385 = vmatpush2.msra.mxu0 %v1341
    %1386 = vmatprep.subr.mxu0 0.0
    %1387 = vmatpush2.msra.mxu0 %v1340
    %1388 = vmatprep.subr.mxu0 0.0
    %1389 = vmatpush2.msra.mxu0 %v1339
    %1390 = vmatprep.subr.mxu0 0.0
    %1391 = vmatpush2.msra.mxu0 %v1338
    %1392 = vmatprep.subr.mxu0 0.0
    %1393 = vmatpush2.msra.mxu0 %v1337
    %1394 = vmatprep.subr.mxu0 0.0
    %1395 = vmatpush2.msra.mxu0 %v1336
    %1396 = vmatprep.subr.mxu0 0.0
    %1397 = vmatpush2.msra.mxu0 %v1335
    %1398 = vmatprep.subr.mxu0 0.0
    %1399 = vmatpush2.msra.mxu0 %v1334
    %1400 = vmatprep.subr.mxu0 0.0
    %1401 = vmatpush2.msra.mxu0 %v1333
    %1402 = vmatprep.subr.mxu0 0.0
    %1403 = vmatpush2.msra.mxu0 %v1332
    %1404 = vmatprep.subr.mxu0 0.0
    %1405 = vmatpush2.msra.mxu0 %v1331
    %1406 = vmatprep.subr.mxu0 0.0
    %1407 = vmatpush2.msra.mxu0 %v1330
    %1408 = vmatprep.subr.mxu0 0.0
    %1409 = vmatpush2.msra.mxu0 %v1329
    %1410 = vmatprep.subr.mxu0 0.0
    %1411 = vmatpush2.msra.mxu0 %v1328
    %1412 = vmatprep.mubr.f32.mxu0 %v1345
    %1413 = vmatmul.mubr.f32.gmra.mxu0 %v1344
    %v1414 = vpop.f32.mrf.mxu0
    %v1415 = vadd.f32 0.0, %v1414
    %v1416 = vpop.f32.mrf.mxu0
    %1417 = vdwg.mxu0
    %v1418 = vadd.f32 %v1235, %v1415
    %v1419 = vrot.slane %v220, 6
    %v1420 = vrot.slane %v221, 6
    %1423 = vmatprep.subr.mxu0 0.0
    %1424 = vmatpush1.msra.mxu0 %v1327
    %1425 = vmatprep.subr.mxu0 0.0
    %1426 = vmatpush1.msra.mxu0 %v1326
    %1427 = vmatprep.subr.mxu0 0.0
    %1428 = vmatpush1.msra.mxu0 %v1325
    %1429 = vmatprep.subr.mxu0 0.0
    %1430 = vmatpush1.msra.mxu0 %v1324
    %1431 = vmatprep.subr.mxu0 0.0
    %1432 = vmatpush1.msra.mxu0 %v1323
    %1433 = vmatprep.subr.mxu0 0.0
    %1434 = vmatpush1.msra.mxu0 %v1322
    %1435 = vmatprep.subr.mxu0 0.0
    %1436 = vmatpush1.msra.mxu0 %v1321
    %1437 = vmatprep.subr.mxu0 0.0
    %1438 = vmatpush1.msra.mxu0 %v1320
    %1439 = vmatprep.subr.mxu0 0.0
    %1440 = vmatpush1.msra.mxu0 %v1319
    %1441 = vmatprep.subr.mxu0 0.0
    %1442 = vmatpush1.msra.mxu0 %v1318
    %1443 = vmatprep.subr.mxu0 0.0
    %1444 = vmatpush1.msra.mxu0 %v1317
    %1445 = vmatprep.subr.mxu0 0.0
    %1446 = vmatpush1.msra.mxu0 %v1316
    %1447 = vmatprep.subr.mxu0 0.0
    %1448 = vmatpush1.msra.mxu0 %v1315
    %1449 = vmatprep.subr.mxu0 0.0
    %1450 = vmatpush1.msra.mxu0 %v1314
    %1451 = vmatprep.subr.mxu0 0.0
    %1452 = vmatpush1.msra.mxu0 %v1313
    %1453 = vmatprep.subr.mxu0 0.0
    %1454 = vmatpush1.msra.mxu0 %v1312
    %1455 = vmatprep.subr.mxu0 0.0
    %1456 = vmatpush2.msra.mxu0 %v1343
    %1457 = vmatprep.subr.mxu0 0.0
    %1458 = vmatpush2.msra.mxu0 %v1342
    %1459 = vmatprep.subr.mxu0 0.0
    %1460 = vmatpush2.msra.mxu0 %v1341
    %1461 = vmatprep.subr.mxu0 0.0
    %1462 = vmatpush2.msra.mxu0 %v1340
    %1463 = vmatprep.subr.mxu0 0.0
    %1464 = vmatpush2.msra.mxu0 %v1339
    %1465 = vmatprep.subr.mxu0 0.0
    %1466 = vmatpush2.msra.mxu0 %v1338
    %1467 = vmatprep.subr.mxu0 0.0
    %1468 = vmatpush2.msra.mxu0 %v1337
    %1469 = vmatprep.subr.mxu0 0.0
    %1470 = vmatpush2.msra.mxu0 %v1336
    %1471 = vmatprep.subr.mxu0 0.0
    %1472 = vmatpush2.msra.mxu0 %v1335
    %1473 = vmatprep.subr.mxu0 0.0
    %1474 = vmatpush2.msra.mxu0 %v1334
    %1475 = vmatprep.subr.mxu0 0.0
    %1476 = vmatpush2.msra.mxu0 %v1333
    %1477 = vmatprep.subr.mxu0 0.0
    %1478 = vmatpush2.msra.mxu0 %v1332
    %1479 = vmatprep.subr.mxu0 0.0
    %1480 = vmatpush2.msra.mxu0 %v1331
    %1481 = vmatprep.subr.mxu0 0.0
    %1482 = vmatpush2.msra.mxu0 %v1330
    %1483 = vmatprep.subr.mxu0 0.0
    %1484 = vmatpush2.msra.mxu0 %v1329
    %1485 = vmatprep.subr.mxu0 0.0
    %1486 = vmatpush2.msra.mxu0 %v1328
    %1487 = vmatprep.mubr.f32.mxu0 %v1420
    %1488 = vmatmul.mubr.f32.gmra.mxu0 %v1419
    %v1489 = vpop.f32.mrf.mxu0
    %v1490 = vadd.f32 0.0, %v1489
    %v1491 = vpop.f32.mrf.mxu0
    %1492 = vdwg.mxu0
    %v1493 = vadd.f32 %v1310, %v1490
    %s1494 = scalar_lea.vmem %s4, 1792
    %v1495 = vld [vmem:[%s1494] sm:$0xff]
    %v1496 = vld [vmem:[%s1494 + $0x8] sm:$0xff]
    %v1497 = vld [vmem:[%s1494 + $0x10] sm:$0xff]
    %v1498 = vld [vmem:[%s1494 + $0x18] sm:$0xff]
    %v1499 = vld [vmem:[%s1494 + $0x20] sm:$0xff]
    %v1500 = vld [vmem:[%s1494 + $0x28] sm:$0xff]
    %v1501 = vld [vmem:[%s1494 + $0x30] sm:$0xff]
    %v1502 = vld [vmem:[%s1494 + $0x38] sm:$0xff]
    %v1503 = vld [vmem:[%s1494 + $0x40] sm:$0xff]
    %v1504 = vld [vmem:[%s1494 + $0x48] sm:$0xff]
    %v1505 = vld [vmem:[%s1494 + $0x50] sm:$0xff]
    %v1506 = vld [vmem:[%s1494 + $0x58] sm:$0xff]
    %v1507 = vld [vmem:[%s1494 + $0x60] sm:$0xff]
    %v1508 = vld [vmem:[%s1494 + $0x68] sm:$0xff]
    %v1509 = vld [vmem:[%s1494 + $0x70] sm:$0xff]
    %v1510 = vld [vmem:[%s1494 + $0x78] sm:$0xff]
    %v1511 = vld [vmem:[%s1494 + $0x80] sm:$0xff]
    %v1512 = vld [vmem:[%s1494 + $0x88] sm:$0xff]
    %v1513 = vld [vmem:[%s1494 + $0x90] sm:$0xff]
    %v1514 = vld [vmem:[%s1494 + $0x98] sm:$0xff]
    %v1515 = vld [vmem:[%s1494 + $0xa0] sm:$0xff]
    %v1516 = vld [vmem:[%s1494 + $0xa8] sm:$0xff]
    %v1517 = vld [vmem:[%s1494 + $0xb0] sm:$0xff]
    %v1518 = vld [vmem:[%s1494 + $0xb8] sm:$0xff]
    %v1519 = vld [vmem:[%s1494 + $0xc0] sm:$0xff]
    %v1520 = vld [vmem:[%s1494 + $0xc8] sm:$0xff]
    %v1521 = vld [vmem:[%s1494 + $0xd0] sm:$0xff]
    %v1522 = vld [vmem:[%s1494 + $0xd8] sm:$0xff]
    %v1523 = vld [vmem:[%s1494 + $0xe0] sm:$0xff]
    %v1524 = vld [vmem:[%s1494 + $0xe8] sm:$0xff]
    %v1525 = vld [vmem:[%s1494 + $0xf0] sm:$0xff]
    %v1526 = vld [vmem:[%s1494 + $0xf8] sm:$0xff]
    %v1527 = vrot.slane %v131, 7
    %v1528 = vrot.slane %v132, 7
    %1531 = vmatprep.subr.mxu0 0.0
    %1532 = vmatpush1.msra.mxu0 %v1510
    %1533 = vmatprep.subr.mxu0 0.0
    %1534 = vmatpush1.msra.mxu0 %v1509
    %1535 = vmatprep.subr.mxu0 0.0
    %1536 = vmatpush1.msra.mxu0 %v1508
    %1537 = vmatprep.subr.mxu0 0.0
    %1538 = vmatpush1.msra.mxu0 %v1507
    %1539 = vmatprep.subr.mxu0 0.0
    %1540 = vmatpush1.msra.mxu0 %v1506
    %1541 = vmatprep.subr.mxu0 0.0
    %1542 = vmatpush1.msra.mxu0 %v1505
    %1543 = vmatprep.subr.mxu0 0.0
    %1544 = vmatpush1.msra.mxu0 %v1504
    %1545 = vmatprep.subr.mxu0 0.0
    %1546 = vmatpush1.msra.mxu0 %v1503
    %1547 = vmatprep.subr.mxu0 0.0
    %1548 = vmatpush1.msra.mxu0 %v1502
    %1549 = vmatprep.subr.mxu0 0.0
    %1550 = vmatpush1.msra.mxu0 %v1501
    %1551 = vmatprep.subr.mxu0 0.0
    %1552 = vmatpush1.msra.mxu0 %v1500
    %1553 = vmatprep.subr.mxu0 0.0
    %1554 = vmatpush1.msra.mxu0 %v1499
    %1555 = vmatprep.subr.mxu0 0.0
    %1556 = vmatpush1.msra.mxu0 %v1498
    %1557 = vmatprep.subr.mxu0 0.0
    %1558 = vmatpush1.msra.mxu0 %v1497
    %1559 = vmatprep.subr.mxu0 0.0
    %1560 = vmatpush1.msra.mxu0 %v1496
    %1561 = vmatprep.subr.mxu0 0.0
    %1562 = vmatpush1.msra.mxu0 %v1495
    %1563 = vmatprep.subr.mxu0 0.0
    %1564 = vmatpush2.msra.mxu0 %v1526
    %1565 = vmatprep.subr.mxu0 0.0
    %1566 = vmatpush2.msra.mxu0 %v1525
    %1567 = vmatprep.subr.mxu0 0.0
    %1568 = vmatpush2.msra.mxu0 %v1524
    %1569 = vmatprep.subr.mxu0 0.0
    %1570 = vmatpush2.msra.mxu0 %v1523
    %1571 = vmatprep.subr.mxu0 0.0
    %1572 = vmatpush2.msra.mxu0 %v1522
    %1573 = vmatprep.subr.mxu0 0.0
    %1574 = vmatpush2.msra.mxu0 %v1521
    %1575 = vmatprep.subr.mxu0 0.0
    %1576 = vmatpush2.msra.mxu0 %v1520
    %1577 = vmatprep.subr.mxu0 0.0
    %1578 = vmatpush2.msra.mxu0 %v1519
    %1579 = vmatprep.subr.mxu0 0.0
    %1580 = vmatpush2.msra.mxu0 %v1518
    %1581 = vmatprep.subr.mxu0 0.0
    %1582 = vmatpush2.msra.mxu0 %v1517
    %1583 = vmatprep.subr.mxu0 0.0
    %1584 = vmatpush2.msra.mxu0 %v1516
    %1585 = vmatprep.subr.mxu0 0.0
    %1586 = vmatpush2.msra.mxu0 %v1515
    %1587 = vmatprep.subr.mxu0 0.0
    %1588 = vmatpush2.msra.mxu0 %v1514
    %1589 = vmatprep.subr.mxu0 0.0
    %1590 = vmatpush2.msra.mxu0 %v1513
    %1591 = vmatprep.subr.mxu0 0.0
    %1592 = vmatpush2.msra.mxu0 %v1512
    %1593 = vmatprep.subr.mxu0 0.0
    %1594 = vmatpush2.msra.mxu0 %v1511
    %1595 = vmatprep.mubr.f32.mxu0 %v1528
    %1596 = vmatmul.mubr.f32.gmra.mxu0 %v1527
    %v1597 = vpop.f32.mrf.mxu0
    %v1598 = vadd.f32 0.0, %v1597
    %v1599 = vpop.f32.mrf.mxu0
    %1600 = vdwg.mxu0
    %v1601 = vadd.f32 %v1418, %v1598
    %v1602 = vrot.slane %v220, 7
    %v1603 = vrot.slane %v221, 7
    %1606 = vmatprep.subr.mxu0 0.0
    %1607 = vmatpush1.msra.mxu0 %v1510
    %1608 = vmatprep.subr.mxu0 0.0
    %1609 = vmatpush1.msra.mxu0 %v1509
    %1610 = vmatprep.subr.mxu0 0.0
    %1611 = vmatpush1.msra.mxu0 %v1508
    %1612 = vmatprep.subr.mxu0 0.0
    %1613 = vmatpush1.msra.mxu0 %v1507
    %1614 = vmatprep.subr.mxu0 0.0
    %1615 = vmatpush1.msra.mxu0 %v1506
    %1616 = vmatprep.subr.mxu0 0.0
    %1617 = vmatpush1.msra.mxu0 %v1505
    %1618 = vmatprep.subr.mxu0 0.0
    %1619 = vmatpush1.msra.mxu0 %v1504
    %1620 = vmatprep.subr.mxu0 0.0
    %1621 = vmatpush1.msra.mxu0 %v1503
    %1622 = vmatprep.subr.mxu0 0.0
    %1623 = vmatpush1.msra.mxu0 %v1502
    %1624 = vmatprep.subr.mxu0 0.0
    %1625 = vmatpush1.msra.mxu0 %v1501
    %1626 = vmatprep.subr.mxu0 0.0
    %1627 = vmatpush1.msra.mxu0 %v1500
    %1628 = vmatprep.subr.mxu0 0.0
    %1629 = vmatpush1.msra.mxu0 %v1499
    %1630 = vmatprep.subr.mxu0 0.0
    %1631 = vmatpush1.msra.mxu0 %v1498
    %1632 = vmatprep.subr.mxu0 0.0
    %1633 = vmatpush1.msra.mxu0 %v1497
    %1634 = vmatprep.subr.mxu0 0.0
    %1635 = vmatpush1.msra.mxu0 %v1496
    %1636 = vmatprep.subr.mxu0 0.0
    %1637 = vmatpush1.msra.mxu0 %v1495
    %1638 = vmatprep.subr.mxu0 0.0
    %1639 = vmatpush2.msra.mxu0 %v1526
    %1640 = vmatprep.subr.mxu0 0.0
    %1641 = vmatpush2.msra.mxu0 %v1525
    %1642 = vmatprep.subr.mxu0 0.0
    %1643 = vmatpush2.msra.mxu0 %v1524
    %1644 = vmatprep.subr.mxu0 0.0
    %1645 = vmatpush2.msra.mxu0 %v1523
    %1646 = vmatprep.subr.mxu0 0.0
    %1647 = vmatpush2.msra.mxu0 %v1522
    %1648 = vmatprep.subr.mxu0 0.0
    %1649 = vmatpush2.msra.mxu0 %v1521
    %1650 = vmatprep.subr.mxu0 0.0
    %1651 = vmatpush2.msra.mxu0 %v1520
    %1652 = vmatprep.subr.mxu0 0.0
    %1653 = vmatpush2.msra.mxu0 %v1519
    %1654 = vmatprep.subr.mxu0 0.0
    %1655 = vmatpush2.msra.mxu0 %v1518
    %1656 = vmatprep.subr.mxu0 0.0
    %1657 = vmatpush2.msra.mxu0 %v1517
    %1658 = vmatprep.subr.mxu0 0.0
    %1659 = vmatpush2.msra.mxu0 %v1516
    %1660 = vmatprep.subr.mxu0 0.0
    %1661 = vmatpush2.msra.mxu0 %v1515
    %1662 = vmatprep.subr.mxu0 0.0
    %1663 = vmatpush2.msra.mxu0 %v1514
    %1664 = vmatprep.subr.mxu0 0.0
    %1665 = vmatpush2.msra.mxu0 %v1513
    %1666 = vmatprep.subr.mxu0 0.0
    %1667 = vmatpush2.msra.mxu0 %v1512
    %1668 = vmatprep.subr.mxu0 0.0
    %1669 = vmatpush2.msra.mxu0 %v1511
    %1670 = vmatprep.mubr.f32.mxu0 %v1603
    %1671 = vmatmul.mubr.f32.gmra.mxu0 %v1602
    %v1672 = vpop.f32.mrf.mxu0
    %v1673 = vadd.f32 0.0, %v1672
    %v1674 = vpop.f32.mrf.mxu0
    %1675 = vdwg.mxu0
    %v1676 = vadd.f32 %v1493, %v1673
    %v1678 = vrot.slane %v1676, 7
    %vm1680 = vcmask 1040384
    %v1681 = vsel %vm1680, %v1601, %v1678
    %v1682 = vld [vmem:[%s5] sm:$0x1]
    %v1684 = vlaneseq
    %v1685 = vshrl.u32 %v1684, 7
    %v1686 = vsub.s32 0, %v1685
    %v1687 = vrot.slane %v1682, %v1686
    %v1689 = vadd.f32 %v1681, %v1687
    %v1690 = vmax.f32 %v1689, 0.0
    %v1691 = vld [vmem:[%s6] sm:$0x3]
    %v1692 = vmul.f32 %v1690, %v1691
    %vm1693 = vcmask 254976
    %v1694 = vsel %vm1693, %v1692, 0.0
    %1695 = vadd.xlane.f32.xlu0 %v1694
    %v1696 = vpop.xlane.xlu0 %1695
    %vm1697 = vcmask 1041408
    %v1698 = vsel %vm1697, %v1696, 0.0
    %v1699 = vrot.slane %v1698, 4
    %v1700 = vadd.f32 %v1698, %v1699
    %v1701 = vrot.slane %v1700, 2
    %v1702 = vadd.f32 %v1700, %v1701
    %v1703 = vrot.slane %v1702, 1
    %v1704 = vadd.f32 %v1702, %v1703
    %v1705 = vld [vmem:[#allocation2] sm:$0x1]
    %v1706 = vadd.f32 %v1704, %v1705
    %v1707 = vxor.u32 %v1706, 2147483648
    %v1708 = vmul.f32 %v1707, 1.442695
    %v1709 = vpow.pop %v1708
    %v1710 = vadd.f32 %v1709, 1.0
    %v1711 = vrcp.pop %v1710
    %v1712 = vmul.f32 1.0, %v1711
    %vm1713 = vcmask 0
    %1714 = vst.msk [vmem:[#allocation3] sm:$0x1] %vm1713, %v1712
    // Predicated region
    $region34: #{classification_net_forward.1} parent=1 // pred_check
      _
    $region35: #{classification_net_forward.1} parent=1 // pred_check_branch
      %1716 = sbr.rel (0) target = $region37
    $region36: #{classification_net_forward.1} parent=1 // pred_region
      %s1718 = ssub.s32 16, 16
      %1719 = vsyncadd [#allocation4], %s1718
      %s1721 = sshll.u32 [#allocation3], 4
      %s1722 = int_to_ptr.vmem [resolvable:$true] %s1721
      %1724 = dma.vmem_to_hbm [thread:$0]  %s1722, 16, %s8, [#allocation4]
    $region37: #{classification_net_forward.1} parent=1 // pred_fallthru
      _
    // Predicated region
    $region38: #{classification_net_forward.1} parent=1 // pred_check
      _
    $region39: #{classification_net_forward.1} parent=1 // pred_check_branch
      %1726 = sbr.rel (0) target = $region41
    $region40: #{classification_net_forward.1} parent=1 // pred_region
      %1727 = dma.done [#allocation4], 16
    $region41: #{classification_net_forward.1} parent=1 // pred_fallthru
      _
    %1728 = vsyncpa [#allocation4], 1

</llo_original>
